<compile_context>
chip_gen: v7x
topology: tpu7x:2x2x1
jax: 0.10.0
libtpu: 0.0.40
codegen_flags: <defaults>
</compile_context>

<pallas_src>
import math

import jax
import jax.numpy as jnp
from jax.experimental import pallas as pl
from jax.experimental.pallas import tpu as pltpu

# ----------------------------- small, BERT-like config -----------------------------
B = 2          # batch
S = 8          # sequence length
BS = B * S     # folded slab rows
H = 32         # hidden size   (bert-base: 768)
NH = 4         # attention heads
DH = H // NH   # head dim
FF = 64        # FFN intermediate size
P = 128        # projection_dim (module default)
VOCAB = 100
LN_EPS = 1e-12
NORM_EPS = 1e-12  # torch.nn.functional.normalize eps

# rows of the packed (NUM_VEC, 128) small-parameter table (each vector starts at lane 0)
(ROW_LN_E_G, ROW_LN_E_B, ROW_BQKV, ROW_BO, ROW_LN1_G, ROW_LN1_B, ROW_BF1, ROW_BF2,
 ROW_LN2_G, ROW_LN2_B, ROW_B1, ROW_B2) = range(12)
NUM_VEC = 12

# row offsets of the packed (W_ROWS, 128) weight slab
W_QKV_ROW = 0            # (H, 3H)
W_O_ROW = W_QKV_ROW + H          # (H, H)
W_F1_ROW = W_O_ROW + H           # (H, FF)
W_F2_ROW = W_F1_ROW + H          # (FF, H)
W_P1_ROW = W_F2_ROW + FF         # (H, H)
W_P2_ROW = W_P1_ROW + H          # (H, P)
W_ROWS = W_P2_ROW + H            # 224


def _layernorm(x, g, b):
    mu = jnp.mean(x, axis=-1, keepdims=True)
    var = jnp.mean((x - mu) ** 2, axis=-1, keepdims=True)
    return (x - mu) * jax.lax.rsqrt(var + LN_EPS) * g + b


# ----------------------------- fused kernel: encoder layer + projection + normalize ------
def fused_encoder_kernel(x_ref, bias_ref, vec_ref, w_ref, out_ref):
    def vec(row, width):
        # static sublane-row + lane-offset-0 slice of the packed vector table
        return vec_ref[row:row + 1, :width]                     # (1, width)

    def wmat(row0, rows, cols):
        # static slice of the packed weight slab
        return w_ref[row0:row0 + rows, :cols]                   # (rows, cols)

    xf = x_ref[...]                                             # (BS, H) activation slab

    # ---- embedding LayerNorm on the whole slab ----
    xf = _layernorm(xf, vec(ROW_LN_E_G, H), vec(ROW_LN_E_B, H))

    # ---- fused Q/K/V projection: ONE lane-dense MXU matmul ----
    qkv = jnp.dot(xf, wmat(W_QKV_ROW, H, 3 * H),
                  preferred_element_type=jnp.float32) + vec(ROW_BQKV, 3 * H)   # (BS, 3H)

    # head split: lane slices -> (NH, BS, DH); concat along sublanes + tile-aligned reshape
    def split_heads(col0):
        return jnp.concatenate(
            [qkv[:, col0 + n * DH: col0 + (n + 1) * DH] for n in range(NH)],
            axis=0).reshape(NH, BS, DH)

    qh = split_heads(0)
    kh = split_heads(H)
    vh = split_heads(2 * H)

    # ---- attention: heads are the only batch dim, B*S folded into rows; cross-batch and
    # key-padding removed by one additive (BS, BS) mask prepared in the wrapper ----
    scale = 1.0 / math.sqrt(DH)
    s = jnp.einsum('nqd,nkd->nqk', qh, kh,
                   preferred_element_type=jnp.float32) * scale                 # (NH, BS, BS)
    s = s + bias_ref[...][None, :, :]
    s = s - jnp.max(s, axis=-1, keepdims=True)
    e = jnp.exp(s)
    # denominator >= 1 after max subtraction (no clamp needed); reciprocal goes to the EUP
    p = e * pl.reciprocal(jnp.sum(e, axis=-1, keepdims=True), approx=True)
    ctx = jnp.einsum('nqk,nkd->nqd', p, vh,
                     preferred_element_type=jnp.float32)                       # (NH, BS, DH)

    # lane-concat heads -> ONE lane-dense output-projection matmul
    ctx_cat = jnp.concatenate([ctx[n] for n in range(NH)], axis=-1)            # (BS, H)
    attn = jnp.dot(ctx_cat, wmat(W_O_ROW, H, H),
                   preferred_element_type=jnp.float32) + vec(ROW_BO, H)

    x1 = _layernorm(xf + attn, vec(ROW_LN1_G, H), vec(ROW_LN1_B, H))

    # ---- FFN on the whole slab ----
    # TODO(synk): HuggingFace bert-base uses exact erf GELU; tanh approximation kept to
    # match the in-file reference.
    hdn = jnp.dot(x1, wmat(W_F1_ROW, H, FF),
                  preferred_element_type=jnp.float32) + vec(ROW_BF1, FF)
    hdn = jax.nn.gelu(hdn, approximate=True)
    ffn = jnp.dot(hdn, wmat(W_F2_ROW, FF, H),
                  preferred_element_type=jnp.float32) + vec(ROW_BF2, H)
    x2 = _layernorm(x1 + ffn, vec(ROW_LN2_G, H), vec(ROW_LN2_B, H))

    # ---- fused projection head + L2 normalize on the CLS rows (row b*S per sequence) ----
    cls = jnp.concatenate([x2[b * S:b * S + 1, :] for b in range(B)], axis=0)  # (B, H)
    h = jnp.dot(cls, wmat(W_P1_ROW, H, H),
                preferred_element_type=jnp.float32) + vec(ROW_B1, H)
    h = jnp.maximum(h, 0.0)                                                    # ReLU
    proj = jnp.dot(h, wmat(W_P2_ROW, H, P),
                   preferred_element_type=jnp.float32) + vec(ROW_B2, P)
    sumsq = jnp.sum(proj * proj, axis=-1, keepdims=True)
    # F.normalize(p=2, dim=1): x / max(||x||, eps) == x * rsqrt(max(||x||^2, eps^2))
    out_ref[...] = proj * jax.lax.rsqrt(jnp.maximum(sumsq, NORM_EPS * NORM_EPS))


# ----------------------------- host-side parameter packing (done ONCE at init) ----------
def pack_params(p):
    def pad_row(v):
        v = v.reshape(1, -1).astype(jnp.float32)
        return jnp.pad(v, ((0, 0), (0, 128 - v.shape[1])))

    def pad_mat(w):
        w = w.astype(jnp.float32)
        return jnp.pad(w, ((0, 0), (0, 128 - w.shape[1])))

    b_qkv = jnp.concatenate([p["bq"], p["bk"], p["bv"]])                # (3H,)
    vec_pack = jnp.concatenate([
        pad_row(p["ln_e_g"]), pad_row(p["ln_e_b"]),
        pad_row(b_qkv), pad_row(p["bo"]),
        pad_row(p["ln1_g"]), pad_row(p["ln1_b"]),
        pad_row(p["bf1"]), pad_row(p["bf2"]),
        pad_row(p["ln2_g"]), pad_row(p["ln2_b"]),
        pad_row(p["b1"]), pad_row(p["b2"]),
    ], axis=0)                                                          # (NUM_VEC, 128)

    w_qkv = jnp.concatenate([p["wq"], p["wk"], p["wv"]], axis=1)        # (H, 3H)
    w_slab = jnp.concatenate([
        pad_mat(w_qkv),      # rows   0: 32
        pad_mat(p["wo"]),    # rows  32: 64
        pad_mat(p["wf1"]),   # rows  64: 96
        pad_mat(p["wf2"]),   # rows  96:160
        pad_mat(p["w1"]),    # rows 160:192
        pad_mat(p["w2"]),    # rows 192:224
    ], axis=0)                                                          # (W_ROWS, 128)
    return vec_pack, w_slab


# ----------------------------- full forward (jitted glue + fused kernel) -----------------
@jax.jit
def reasoning_path_encoder_forward(input_ids, attention_mask, token_type_ids,
                                   word_emb, pos_emb, type_emb, vec_pack, w_slab):
    # embedding gather (plain-JAX glue)
    pos_ids = jnp.arange(S)
    emb = (word_emb[input_ids]
           + pos_emb[pos_ids][None, :, :]
           + type_emb[token_type_ids]).astype(jnp.float32)              # (B, S, H)
    x_flat = emb.reshape(BS, H)

    # combined additive attention mask over the folded slab: 0 where query/key are in the
    # same sequence AND the key is not padded, -1e9 otherwise (keep scores in f32).
    batch_ids = jnp.arange(BS) // S
    same_seq = batch_ids[:, None] == batch_ids[None, :]
    key_ok = attention_mask.reshape(BS).astype(jnp.float32) > 0.0
    attn_bias = jnp.where(same_seq & key_ok[None, :], 0.0, -1e9).astype(jnp.float32)  # (BS, BS)

    vmem = pl.BlockSpec(memory_space=pltpu.MemorySpace.VMEM)
    return pl.pallas_call(
        fused_encoder_kernel,
        out_shape=jax.ShapeDtypeStruct((B, P), jnp.float32),
        in_specs=[vmem, vmem, vmem, vmem],
        out_specs=vmem,
        compiler_params=pltpu.CompilerParams(vmem_limit_bytes=32 * 1024 * 1024),
    )(x_flat, attn_bias, vec_pack, w_slab)


# ----------------------------- parameter init (deterministic) -----------------------------
def init_params(key):
    ks = iter(jax.random.split(key, 32))
    nrm = lambda shape: 0.02 * jax.random.normal(next(ks), shape, jnp.float32)
    return dict(
        word=nrm((VOCAB, H)), pos=nrm((S, H)), type=nrm((2, H)),
        ln_e_g=1.0 + nrm((H,)), ln_e_b=nrm((H,)),
        wq=nrm((H, H)), bq=nrm((H,)),
        wk=nrm((H, H)), bk=nrm((H,)),
        wv=nrm((H, H)), bv=nrm((H,)),
        wo=nrm((H, H)), bo=nrm((H,)),
        ln1_g=1.0 + nrm((H,)), ln1_b=nrm((H,)),
        wf1=nrm((H, FF)), bf1=nrm((FF,)),
        wf2=nrm((FF, H)), bf2=nrm((H,)),
        ln2_g=1.0 + nrm((H,)), ln2_b=nrm((H,)),
        w1=nrm((H, H)), b1=nrm((H,)),
        w2=nrm((H, P)), b2=nrm((P,)),
    )


# ----------------------------- pure-JAX reference for verification -----------------------
def reference_forward(input_ids, attention_mask, token_type_ids, p):
    pos_ids = jnp.arange(S)
    x = (p["word"][input_ids] + p["pos"][pos_ids][None, :, :]
         + p["type"][token_type_ids]).astype(jnp.float32)
    x = _layernorm(x, p["ln_e_g"], p["ln_e_b"])
    q = x @ p["wq"] + p["bq"]
    k = x @ p["wk"] + p["bk"]
    v = x @ p["wv"] + p["bv"]
    qh = q.reshape(B, S, NH, DH).transpose(0, 2, 1, 3)
    kh = k.reshape(B, S, NH, DH).transpose(0, 2, 1, 3)
    vh = v.reshape(B, S, NH, DH).transpose(0, 2, 1, 3)
    s = jnp.einsum('bnqd,bnkd->bnqk', qh, kh) / math.sqrt(DH)
    bias = (1.0 - attention_mask.astype(jnp.float32)) * (-1e9)
    s = s + bias[:, None, None, :]
    pw = jax.nn.softmax(s, axis=-1)
    ctx = jnp.einsum('bnqk,bnkd->bnqd', pw, vh).transpose(0, 2, 1, 3).reshape(B, S, H)
    attn = ctx @ p["wo"] + p["bo"]
    x = _layernorm(x + attn, p["ln1_g"], p["ln1_b"])
    ffn = jax.nn.gelu(x @ p["wf1"] + p["bf1"], approximate=True) @ p["wf2"] + p["bf2"]
    x = _layernorm(x + ffn, p["ln2_g"], p["ln2_b"])
    cls = x[:, 0, :]
    h = jnp.maximum(cls @ p["w1"] + p["b1"], 0.0)
    pr = h @ p["w2"] + p["b2"]
    n = jnp.sqrt(jnp.sum(pr * pr, axis=-1, keepdims=True))
    return pr / jnp.maximum(n, NORM_EPS)


# ----------------------------- main -----------------------------
if __name__ == "__main__":
    key = jax.random.PRNGKey(0)
    k_param, k_ids = jax.random.split(key)
    params = init_params(k_param)
    vec_pack, w_slab = pack_params(params)          # hoisted out of the per-call path

    input_ids = jax.random.randint(k_ids, (B, S), 0, VOCAB, dtype=jnp.int32)
    attention_mask = jnp.ones((B, S), jnp.int32).at[1, S - 2:].set(0)   # pad last 2 of ex 1
    token_type_ids = jnp.zeros((B, S), jnp.int32)

    out = reasoning_path_encoder_forward(
        input_ids, attention_mask, token_type_ids,
        params["word"], params["pos"], params["type"], vec_pack, w_slab)
    out = jax.block_until_ready(out)

    ref = reference_forward(input_ids, attention_mask, token_type_ids, params)

    assert out.shape == (B, P)
    assert bool(jnp.all(jnp.isfinite(out)))
    # unit L2 norm per row (F.normalize semantics)
    assert jnp.allclose(jnp.linalg.norm(out, axis=1), 1.0, atol=1e-4)
    assert jnp.allclose(out, ref, atol=2e-3, rtol=2e-3)

    print("KERNEL_OK")
</pallas_src>

<mosaic_0001>
module attributes {stable_mosaic.version = 11 : i64} {
  func.func @fused_encoder_kernel(%arg0: memref<16x32xf32, #tpu.memory_space<vmem>>, %arg1: memref<16x16xf32, #tpu.memory_space<vmem>>, %arg2: memref<12x128xf32, #tpu.memory_space<vmem>>, %arg3: memref<224x128xf32, #tpu.memory_space<vmem>>, %arg4: memref<2x128xf32, #tpu.memory_space<vmem>>) attributes {dimension_semantics = [], scalar_prefetch = 0 : i64, scratch_operands = 0 : i64, tpu.core_type = #tpu.core_type<tc>} {
    %c0 = arith.constant 0 : index
    %c0_0 = arith.constant 0 : index
    %0 = vector.load %arg0[%c0, %c0_0] : memref<16x32xf32, #tpu.memory_space<vmem>>, vector<16x32xf32>
    %c0_1 = arith.constant 0 : index
    %c0_2 = arith.constant 0 : index
    %1 = vector.load %arg2[%c0_1, %c0_2] : memref<12x128xf32, #tpu.memory_space<vmem>>, vector<1x32xf32>
    %c1 = arith.constant 1 : index
    %c0_3 = arith.constant 0 : index
    %2 = vector.load %arg2[%c1, %c0_3] : memref<12x128xf32, #tpu.memory_space<vmem>>, vector<1x32xf32>
    %cst = arith.constant dense<0.000000e+00> : vector<16xf32>
    %3 = vector.multi_reduction <add>, %0, %cst [1] : vector<16x32xf32> to vector<16xf32>
    %4 = vector.shape_cast %3 : vector<16xf32> to vector<16x1xf32>
    %cst_4 = arith.constant 3.200000e+01 : f32
    %5 = vector.broadcast %cst_4 : f32 to vector<16x1xf32>
    %6 = arith.divf %4, %5 : vector<16x1xf32>
    %7 = vector.broadcast %6 : vector<16x1xf32> to vector<16x32xf32>
    %8 = arith.subf %0, %7 : vector<16x32xf32>
    %9 = arith.mulf %8, %8 : vector<16x32xf32>
    %cst_5 = arith.constant dense<0.000000e+00> : vector<16xf32>
    %10 = vector.multi_reduction <add>, %9, %cst_5 [1] : vector<16x32xf32> to vector<16xf32>
    %11 = vector.shape_cast %10 : vector<16xf32> to vector<16x1xf32>
    %cst_6 = arith.constant 3.200000e+01 : f32
    %12 = vector.broadcast %cst_6 : f32 to vector<16x1xf32>
    %13 = arith.divf %11, %12 : vector<16x1xf32>
    %14 = vector.broadcast %6 : vector<16x1xf32> to vector<16x32xf32>
    %15 = arith.subf %0, %14 : vector<16x32xf32>
    %cst_7 = arith.constant 9.99999996E-13 : f32
    %16 = vector.broadcast %cst_7 : f32 to vector<16x1xf32>
    %17 = arith.addf %13, %16 : vector<16x1xf32>
    %18 = math.rsqrt %17 : vector<16x1xf32>
    %19 = vector.broadcast %18 : vector<16x1xf32> to vector<16x32xf32>
    %20 = arith.mulf %15, %19 : vector<16x32xf32>
    %21 = vector.broadcast %1 : vector<1x32xf32> to vector<16x32xf32>
    %22 = arith.mulf %20, %21 : vector<16x32xf32>
    %23 = vector.broadcast %2 : vector<1x32xf32> to vector<16x32xf32>
    %24 = arith.addf %22, %23 : vector<16x32xf32>
    %c0_8 = arith.constant 0 : index
    %c0_9 = arith.constant 0 : index
    %25 = vector.load %arg3[%c0_8, %c0_9] : memref<224x128xf32, #tpu.memory_space<vmem>>, vector<32x96xf32>
    %cst_10 = arith.constant dense<0.000000e+00> : vector<16x96xf32>
    %26 = tpu.matmul %24, %25, %cst_10 {dimension_numbers = #tpu.dot_dimension_numbers<[1], [0], [0], [1], [0, 0, 1, 1], [], []>} : vector<16x32xf32>, vector<32x96xf32>, vector<16x96xf32> -> vector<16x96xf32>
    %c2 = arith.constant 2 : index
    %c0_11 = arith.constant 0 : index
    %27 = vector.load %arg2[%c2, %c0_11] : memref<12x128xf32, #tpu.memory_space<vmem>>, vector<1x96xf32>
    %28 = vector.broadcast %27 : vector<1x96xf32> to vector<16x96xf32>
    %29 = arith.addf %26, %28 : vector<16x96xf32>
    %30 = vector.extract_strided_slice %29 {offsets = [0, 0], sizes = [16, 8], strides = [1, 1]} : vector<16x96xf32> to vector<16x8xf32>
    %31 = vector.extract_strided_slice %29 {offsets = [0, 8], sizes = [16, 8], strides = [1, 1]} : vector<16x96xf32> to vector<16x8xf32>
    %32 = vector.extract_strided_slice %29 {offsets = [0, 16], sizes = [16, 8], strides = [1, 1]} : vector<16x96xf32> to vector<16x8xf32>
    %33 = vector.extract_strided_slice %29 {offsets = [0, 24], sizes = [16, 8], strides = [1, 1]} : vector<16x96xf32> to vector<16x8xf32>
    %34 = tpu.concatenate %30, %31, %32, %33 in 0 : vector<16x8xf32>, vector<16x8xf32>, vector<16x8xf32>, vector<16x8xf32> -> vector<64x8xf32>
    %35 = vector.shape_cast %34 : vector<64x8xf32> to vector<4x16x8xf32>
    %36 = vector.extract_strided_slice %29 {offsets = [0, 32], sizes = [16, 8], strides = [1, 1]} : vector<16x96xf32> to vector<16x8xf32>
    %37 = vector.extract_strided_slice %29 {offsets = [0, 40], sizes = [16, 8], strides = [1, 1]} : vector<16x96xf32> to vector<16x8xf32>
    %38 = vector.extract_strided_slice %29 {offsets = [0, 48], sizes = [16, 8], strides = [1, 1]} : vector<16x96xf32> to vector<16x8xf32>
    %39 = vector.extract_strided_slice %29 {offsets = [0, 56], sizes = [16, 8], strides = [1, 1]} : vector<16x96xf32> to vector<16x8xf32>
    %40 = tpu.concatenate %36, %37, %38, %39 in 0 : vector<16x8xf32>, vector<16x8xf32>, vector<16x8xf32>, vector<16x8xf32> -> vector<64x8xf32>
    %41 = vector.shape_cast %40 : vector<64x8xf32> to vector<4x16x8xf32>
    %42 = vector.extract_strided_slice %29 {offsets = [0, 64], sizes = [16, 8], strides = [1, 1]} : vector<16x96xf32> to vector<16x8xf32>
    %43 = vector.extract_strided_slice %29 {offsets = [0, 72], sizes = [16, 8], strides = [1, 1]} : vector<16x96xf32> to vector<16x8xf32>
    %44 = vector.extract_strided_slice %29 {offsets = [0, 80], sizes = [16, 8], strides = [1, 1]} : vector<16x96xf32> to vector<16x8xf32>
    %45 = vector.extract_strided_slice %29 {offsets = [0, 88], sizes = [16, 8], strides = [1, 1]} : vector<16x96xf32> to vector<16x8xf32>
    %46 = tpu.concatenate %42, %43, %44, %45 in 0 : vector<16x8xf32>, vector<16x8xf32>, vector<16x8xf32>, vector<16x8xf32> -> vector<64x8xf32>
    %47 = vector.shape_cast %46 : vector<64x8xf32> to vector<4x16x8xf32>
    "tpu.trace_start"() <{level = 10 : i32, message = "nqd,nkd->nqk"}> : () -> ()
    %cst_12 = arith.constant dense<0.000000e+00> : vector<4x16x16xf32>
    %48 = tpu.matmul %35, %41, %cst_12 {dimension_numbers = #tpu.dot_dimension_numbers<[2], [2], [1], [1], [0, 0, 0, 1, 1, 1], [0], [0]>} : vector<4x16x8xf32>, vector<4x16x8xf32>, vector<4x16x16xf32> -> vector<4x16x16xf32>
    "tpu.trace_stop"() : () -> ()
    %cst_13 = arith.constant 0.353553385 : f32
    %49 = vector.broadcast %cst_13 : f32 to vector<4x16x16xf32>
    %50 = arith.mulf %48, %49 : vector<4x16x16xf32>
    %c0_14 = arith.constant 0 : index
    %c0_15 = arith.constant 0 : index
    %51 = vector.load %arg1[%c0_14, %c0_15] : memref<16x16xf32, #tpu.memory_space<vmem>>, vector<16x16xf32>
    %52 = vector.shape_cast %51 : vector<16x16xf32> to vector<1x16x16xf32>
    %53 = vector.broadcast %52 : vector<1x16x16xf32> to vector<4x16x16xf32>
    %54 = arith.addf %50, %53 : vector<4x16x16xf32>
    %cst_16 = arith.constant dense<0xFF800000> : vector<4x16xf32>
    %55 = vector.multi_reduction <maximumf>, %54, %cst_16 [2] : vector<4x16x16xf32> to vector<4x16xf32>
    %56 = vector.shape_cast %55 : vector<4x16xf32> to vector<4x16x1xf32>
    %57 = vector.broadcast %56 : vector<4x16x1xf32> to vector<4x16x16xf32>
    %58 = arith.subf %54, %57 : vector<4x16x16xf32>
    %59 = math.exp %58 : vector<4x16x16xf32>
    %cst_17 = arith.constant dense<0.000000e+00> : vector<4x16xf32>
    %60 = vector.multi_reduction <add>, %59, %cst_17 [2] : vector<4x16x16xf32> to vector<4x16xf32>
    %61 = vector.shape_cast %60 : vector<4x16xf32> to vector<4x16x1xf32>
    %62 = tpu.reciprocal %61 {approx = true} : vector<4x16x1xf32> -> vector<4x16x1xf32>
    %63 = vector.broadcast %62 : vector<4x16x1xf32> to vector<4x16x16xf32>
    %64 = arith.mulf %59, %63 : vector<4x16x16xf32>
    "tpu.trace_start"() <{level = 10 : i32, message = "nqk,nkd->nqd"}> : () -> ()
    %cst_18 = arith.constant dense<0.000000e+00> : vector<4x16x8xf32>
    %65 = tpu.matmul %64, %47, %cst_18 {dimension_numbers = #tpu.dot_dimension_numbers<[2], [1], [1], [2], [0, 0, 0, 1, 1, 2], [0], [0]>} : vector<4x16x16xf32>, vector<4x16x8xf32>, vector<4x16x8xf32> -> vector<4x16x8xf32>
    "tpu.trace_stop"() : () -> ()
    %66 = vector.extract_strided_slice %65 {offsets = [0, 0, 0], sizes = [1, 16, 8], strides = [1, 1, 1]} : vector<4x16x8xf32> to vector<1x16x8xf32>
    %67 = vector.shape_cast %66 : vector<1x16x8xf32> to vector<16x8xf32>
    %68 = vector.extract_strided_slice %65 {offsets = [1, 0, 0], sizes = [1, 16, 8], strides = [1, 1, 1]} : vector<4x16x8xf32> to vector<1x16x8xf32>
    %69 = vector.shape_cast %68 : vector<1x16x8xf32> to vector<16x8xf32>
    %70 = vector.extract_strided_slice %65 {offsets = [2, 0, 0], sizes = [1, 16, 8], strides = [1, 1, 1]} : vector<4x16x8xf32> to vector<1x16x8xf32>
    %71 = vector.shape_cast %70 : vector<1x16x8xf32> to vector<16x8xf32>
    %72 = vector.extract_strided_slice %65 {offsets = [3, 0, 0], sizes = [1, 16, 8], strides = [1, 1, 1]} : vector<4x16x8xf32> to vector<1x16x8xf32>
    %73 = vector.shape_cast %72 : vector<1x16x8xf32> to vector<16x8xf32>
    %74 = tpu.concatenate %67, %69, %71, %73 in 1 : vector<16x8xf32>, vector<16x8xf32>, vector<16x8xf32>, vector<16x8xf32> -> vector<16x32xf32>
    %c32 = arith.constant 32 : index
    %c0_19 = arith.constant 0 : index
    %75 = vector.load %arg3[%c32, %c0_19] : memref<224x128xf32, #tpu.memory_space<vmem>>, vector<32x32xf32>
    %cst_20 = arith.constant dense<0.000000e+00> : vector<16x32xf32>
    %76 = tpu.matmul %74, %75, %cst_20 {dimension_numbers = #tpu.dot_dimension_numbers<[1], [0], [0], [1], [0, 0, 1, 1], [], []>} : vector<16x32xf32>, vector<32x32xf32>, vector<16x32xf32> -> vector<16x32xf32>
    %c3 = arith.constant 3 : index
    %c0_21 = arith.constant 0 : index
    %77 = vector.load %arg2[%c3, %c0_21] : memref<12x128xf32, #tpu.memory_space<vmem>>, vector<1x32xf32>
    %78 = vector.broadcast %77 : vector<1x32xf32> to vector<16x32xf32>
    %79 = arith.addf %76, %78 : vector<16x32xf32>
    %80 = arith.addf %24, %79 : vector<16x32xf32>
    %c4 = arith.constant 4 : index
    %c0_22 = arith.constant 0 : index
    %81 = vector.load %arg2[%c4, %c0_22] : memref<12x128xf32, #tpu.memory_space<vmem>>, vector<1x32xf32>
    %c5 = arith.constant 5 : index
    %c0_23 = arith.constant 0 : index
    %82 = vector.load %arg2[%c5, %c0_23] : memref<12x128xf32, #tpu.memory_space<vmem>>, vector<1x32xf32>
    %cst_24 = arith.constant dense<0.000000e+00> : vector<16xf32>
    %83 = vector.multi_reduction <add>, %80, %cst_24 [1] : vector<16x32xf32> to vector<16xf32>
    %84 = vector.shape_cast %83 : vector<16xf32> to vector<16x1xf32>
    %cst_25 = arith.constant 3.200000e+01 : f32
    %85 = vector.broadcast %cst_25 : f32 to vector<16x1xf32>
    %86 = arith.divf %84, %85 : vector<16x1xf32>
    %87 = vector.broadcast %86 : vector<16x1xf32> to vector<16x32xf32>
    %88 = arith.subf %80, %87 : vector<16x32xf32>
    %89 = arith.mulf %88, %88 : vector<16x32xf32>
    %cst_26 = arith.constant dense<0.000000e+00> : vector<16xf32>
    %90 = vector.multi_reduction <add>, %89, %cst_26 [1] : vector<16x32xf32> to vector<16xf32>
    %91 = vector.shape_cast %90 : vector<16xf32> to vector<16x1xf32>
    %cst_27 = arith.constant 3.200000e+01 : f32
    %92 = vector.broadcast %cst_27 : f32 to vector<16x1xf32>
    %93 = arith.divf %91, %92 : vector<16x1xf32>
    %94 = vector.broadcast %86 : vector<16x1xf32> to vector<16x32xf32>
    %95 = arith.subf %80, %94 : vector<16x32xf32>
    %cst_28 = arith.constant 9.99999996E-13 : f32
    %96 = vector.broadcast %cst_28 : f32 to vector<16x1xf32>
    %97 = arith.addf %93, %96 : vector<16x1xf32>
    %98 = math.rsqrt %97 : vector<16x1xf32>
    %99 = vector.broadcast %98 : vector<16x1xf32> to vector<16x32xf32>
    %100 = arith.mulf %95, %99 : vector<16x32xf32>
    %101 = vector.broadcast %81 : vector<1x32xf32> to vector<16x32xf32>
    %102 = arith.mulf %100, %101 : vector<16x32xf32>
    %103 = vector.broadcast %82 : vector<1x32xf32> to vector<16x32xf32>
    %104 = arith.addf %102, %103 : vector<16x32xf32>
    %c64 = arith.constant 64 : index
    %c0_29 = arith.constant 0 : index
    %105 = vector.load %arg3[%c64, %c0_29] : memref<224x128xf32, #tpu.memory_space<vmem>>, vector<32x64xf32>
    %cst_30 = arith.constant dense<0.000000e+00> : vector<16x64xf32>
    %106 = tpu.matmul %104, %105, %cst_30 {dimension_numbers = #tpu.dot_dimension_numbers<[1], [0], [0], [1], [0, 0, 1, 1], [], []>} : vector<16x32xf32>, vector<32x64xf32>, vector<16x64xf32> -> vector<16x64xf32>
    %c6 = arith.constant 6 : index
    %c0_31 = arith.constant 0 : index
    %107 = vector.load %arg2[%c6, %c0_31] : memref<12x128xf32, #tpu.memory_space<vmem>>, vector<1x64xf32>
    %108 = vector.broadcast %107 : vector<1x64xf32> to vector<16x64xf32>
    %109 = arith.addf %106, %108 : vector<16x64xf32>
    %110 = arith.mulf %109, %109 : vector<16x64xf32>
    %111 = arith.mulf %109, %110 : vector<16x64xf32>
    %cst_32 = arith.constant 4.471500e-02 : f32
    %112 = vector.broadcast %cst_32 : f32 to vector<16x64xf32>
    %113 = arith.mulf %112, %111 : vector<16x64xf32>
    %114 = arith.addf %109, %113 : vector<16x64xf32>
    %cst_33 = arith.constant 0.797884583 : f32
    %115 = vector.broadcast %cst_33 : f32 to vector<16x64xf32>
    %116 = arith.mulf %115, %114 : vector<16x64xf32>
    %117 = math.tanh %116 : vector<16x64xf32>
    %cst_34 = arith.constant 1.000000e+00 : f32
    %118 = vector.broadcast %cst_34 : f32 to vector<16x64xf32>
    %119 = arith.addf %118, %117 : vector<16x64xf32>
    %cst_35 = arith.constant 5.000000e-01 : f32
    %120 = vector.broadcast %cst_35 : f32 to vector<16x64xf32>
    %121 = arith.mulf %120, %119 : vector<16x64xf32>
    %122 = arith.mulf %109, %121 : vector<16x64xf32>
    %c96 = arith.constant 96 : index
    %c0_36 = arith.constant 0 : index
    %123 = vector.load %arg3[%c96, %c0_36] : memref<224x128xf32, #tpu.memory_space<vmem>>, vector<64x32xf32>
    %cst_37 = arith.constant dense<0.000000e+00> : vector<16x32xf32>
    %124 = tpu.matmul %122, %123, %cst_37 {dimension_numbers = #tpu.dot_dimension_numbers<[1], [0], [0], [1], [0, 0, 1, 1], [], []>} : vector<16x64xf32>, vector<64x32xf32>, vector<16x32xf32> -> vector<16x32xf32>
    %c7 = arith.constant 7 : index
    %c0_38 = arith.constant 0 : index
    %125 = vector.load %arg2[%c7, %c0_38] : memref<12x128xf32, #tpu.memory_space<vmem>>, vector<1x32xf32>
    %126 = vector.broadcast %125 : vector<1x32xf32> to vector<16x32xf32>
    %127 = arith.addf %124, %126 : vector<16x32xf32>
    %128 = arith.addf %104, %127 : vector<16x32xf32>
    %c8 = arith.constant 8 : index
    %c0_39 = arith.constant 0 : index
    %129 = vector.load %arg2[%c8, %c0_39] : memref<12x128xf32, #tpu.memory_space<vmem>>, vector<1x32xf32>
    %c9 = arith.constant 9 : index
    %c0_40 = arith.constant 0 : index
    %130 = vector.load %arg2[%c9, %c0_40] : memref<12x128xf32, #tpu.memory_space<vmem>>, vector<1x32xf32>
    %cst_41 = arith.constant dense<0.000000e+00> : vector<16xf32>
    %131 = vector.multi_reduction <add>, %128, %cst_41 [1] : vector<16x32xf32> to vector<16xf32>
    %132 = vector.shape_cast %131 : vector<16xf32> to vector<16x1xf32>
    %cst_42 = arith.constant 3.200000e+01 : f32
    %133 = vector.broadcast %cst_42 : f32 to vector<16x1xf32>
    %134 = arith.divf %132, %133 : vector<16x1xf32>
    %135 = vector.broadcast %134 : vector<16x1xf32> to vector<16x32xf32>
    %136 = arith.subf %128, %135 : vector<16x32xf32>
    %137 = arith.mulf %136, %136 : vector<16x32xf32>
    %cst_43 = arith.constant dense<0.000000e+00> : vector<16xf32>
    %138 = vector.multi_reduction <add>, %137, %cst_43 [1] : vector<16x32xf32> to vector<16xf32>
    %139 = vector.shape_cast %138 : vector<16xf32> to vector<16x1xf32>
    %cst_44 = arith.constant 3.200000e+01 : f32
    %140 = vector.broadcast %cst_44 : f32 to vector<16x1xf32>
    %141 = arith.divf %139, %140 : vector<16x1xf32>
    %142 = vector.broadcast %134 : vector<16x1xf32> to vector<16x32xf32>
    %143 = arith.subf %128, %142 : vector<16x32xf32>
    %cst_45 = arith.constant 9.99999996E-13 : f32
    %144 = vector.broadcast %cst_45 : f32 to vector<16x1xf32>
    %145 = arith.addf %141, %144 : vector<16x1xf32>
    %146 = math.rsqrt %145 : vector<16x1xf32>
    %147 = vector.broadcast %146 : vector<16x1xf32> to vector<16x32xf32>
    %148 = arith.mulf %143, %147 : vector<16x32xf32>
    %149 = vector.broadcast %129 : vector<1x32xf32> to vector<16x32xf32>
    %150 = arith.mulf %148, %149 : vector<16x32xf32>
    %151 = vector.broadcast %130 : vector<1x32xf32> to vector<16x32xf32>
    %152 = arith.addf %150, %151 : vector<16x32xf32>
    %153 = vector.extract_strided_slice %152 {offsets = [0, 0], sizes = [1, 32], strides = [1, 1]} : vector<16x32xf32> to vector<1x32xf32>
    %154 = vector.extract_strided_slice %152 {offsets = [8, 0], sizes = [1, 32], strides = [1, 1]} : vector<16x32xf32> to vector<1x32xf32>
    %155 = tpu.concatenate %153, %154 in 0 : vector<1x32xf32>, vector<1x32xf32> -> vector<2x32xf32>
    %c160 = arith.constant 160 : index
    %c0_46 = arith.constant 0 : index
    %156 = vector.load %arg3[%c160, %c0_46] : memref<224x128xf32, #tpu.memory_space<vmem>>, vector<32x32xf32>
    %cst_47 = arith.constant dense<0.000000e+00> : vector<2x32xf32>
    %157 = tpu.matmul %155, %156, %cst_47 {dimension_numbers = #tpu.dot_dimension_numbers<[1], [0], [0], [1], [0, 0, 1, 1], [], []>} : vector<2x32xf32>, vector<32x32xf32>, vector<2x32xf32> -> vector<2x32xf32>
    %c10 = arith.constant 10 : index
    %c0_48 = arith.constant 0 : index
    %158 = vector.load %arg2[%c10, %c0_48] : memref<12x128xf32, #tpu.memory_space<vmem>>, vector<1x32xf32>
    %159 = vector.broadcast %158 : vector<1x32xf32> to vector<2x32xf32>
    %160 = arith.addf %157, %159 : vector<2x32xf32>
    %cst_49 = arith.constant 0.000000e+00 : f32
    %161 = vector.broadcast %cst_49 : f32 to vector<2x32xf32>
    %162 = arith.maximumf %160, %161 : vector<2x32xf32>
    %c192 = arith.constant 192 : index
    %c0_50 = arith.constant 0 : index
    %163 = vector.load %arg3[%c192, %c0_50] : memref<224x128xf32, #tpu.memory_space<vmem>>, vector<32x128xf32>
    %cst_51 = arith.constant dense<0.000000e+00> : vector<2x128xf32>
    %164 = tpu.matmul %162, %163, %cst_51 {dimension_numbers = #tpu.dot_dimension_numbers<[1], [0], [0], [1], [0, 0, 1, 1], [], []>} : vector<2x32xf32>, vector<32x128xf32>, vector<2x128xf32> -> vector<2x128xf32>
    %c11 = arith.constant 11 : index
    %c0_52 = arith.constant 0 : index
    %165 = vector.load %arg2[%c11, %c0_52] : memref<12x128xf32, #tpu.memory_space<vmem>>, vector<1x128xf32>
    %166 = vector.broadcast %165 : vector<1x128xf32> to vector<2x128xf32>
    %167 = arith.addf %164, %166 : vector<2x128xf32>
    %168 = arith.mulf %167, %167 : vector<2x128xf32>
    %cst_53 = arith.constant dense<0.000000e+00> : vector<2xf32>
    %169 = vector.multi_reduction <add>, %168, %cst_53 [1] : vector<2x128xf32> to vector<2xf32>
    %170 = vector.shape_cast %169 : vector<2xf32> to vector<2x1xf32>
    %cst_54 = arith.constant 1.000000e-24 : f32
    %171 = vector.broadcast %cst_54 : f32 to vector<2x1xf32>
    %172 = arith.maximumf %170, %171 : vector<2x1xf32>
    %173 = math.rsqrt %172 : vector<2x1xf32>
    %174 = vector.broadcast %173 : vector<2x1xf32> to vector<2x128xf32>
    %175 = arith.mulf %167, %174 : vector<2x128xf32>
    %c0_55 = arith.constant 0 : index
    %c0_56 = arith.constant 0 : index
    %176 = vector.load %arg4[%c0_55, %c0_56] : memref<2x128xf32, #tpu.memory_space<vmem>>, vector<2x128xf32>
    tpu.vector_store %arg4[%c0_55, %c0_56], %175 {strides = array<i32>} : memref<2x128xf32, #tpu.memory_space<vmem>>, vector<2x128xf32>,
    return
  }
}

</mosaic_0001>

<llo_original>
// kernel: reasoning_path_encoder_forward.1
$region0: #{reasoning_path_encoder_forward.1}
  #allocation0 [shape = 'u32[]', space=smem, size = 0x4, offset = 0x4, fixed_abs, tag = 'smem constant byte address 0x4 - core index']
  #allocation1 [shape = 'u32[144,128]{1,0:T(1,128)}', space=vmem, size = 0x12000, scoped, tag = 'internal scratch']
  %s0 = inlined_call_operand.vmem [shape: f32[16,32], index: 0, kind: input, shape index: {}]
  %s1 = inlined_call_operand.vmem [shape: f32[16,16], index: 1, kind: input, shape index: {}]
  %s2 = inlined_call_operand.vmem [shape: f32[12,128], index: 2, kind: input, shape index: {}]
  %s3 = inlined_call_operand.vmem [shape: f32[224,128], index: 3, kind: input, shape index: {}]
  %s4 = inlined_call_operand.hbm [shape: f32[2,128], index: 4, kind: output, shape index: {}]
  %s5 = sld [smem:[#allocation0]]
  $region26: #{reasoning_path_encoder_forward.1} parent=0
    _
  %s7 = ssub.s32 1, %s5
  %s8 = scalar_select 0, %s7, %s5
  $region1: #{reasoning_path_encoder_forward.1} parent=0
    #allocation2 [shape = 'u8[1024]{0}', space=vmem, size = 0x400, scoped, tag = 'output window, operand 0, single buffered']
    #allocation3 [shape = 's32[1]{0}', space=sflag, size = 0x4, scoped, tag = 'scoped memory for reasoning_path_encoder_forward.1']
    %9 = vsyncpa [#allocation3], 0
    // Predicated region
    $region2: #{reasoning_path_encoder_forward.1} parent=1 // pred_check
      _
    $region3: #{reasoning_path_encoder_forward.1} parent=1 // pred_check_branch
      %11 = sbr.rel (0) target = $region5
    $region4: #{reasoning_path_encoder_forward.1} parent=1 // pred_region
      _
    $region5: #{reasoning_path_encoder_forward.1} parent=1 // pred_fallthru
      _
    // Predicated region
    $region6: #{reasoning_path_encoder_forward.1} parent=1 // pred_check
      _
    $region7: #{reasoning_path_encoder_forward.1} parent=1 // pred_check_branch
      %13 = sbr.rel (0) target = $region9
    $region8: #{reasoning_path_encoder_forward.1} parent=1 // pred_region
      _
    $region9: #{reasoning_path_encoder_forward.1} parent=1 // pred_fallthru
      _
    // Predicated region
    $region10: #{reasoning_path_encoder_forward.1} parent=1 // pred_check
      _
    $region11: #{reasoning_path_encoder_forward.1} parent=1 // pred_check_branch
      %15 = sbr.rel (0) target = $region13
    $region12: #{reasoning_path_encoder_forward.1} parent=1 // pred_region
      _
    $region13: #{reasoning_path_encoder_forward.1} parent=1 // pred_fallthru
      _
    // Predicated region
    $region14: #{reasoning_path_encoder_forward.1} parent=1 // pred_check
      _
    $region15: #{reasoning_path_encoder_forward.1} parent=1 // pred_check_branch
      %17 = sbr.rel (0) target = $region17
    $region16: #{reasoning_path_encoder_forward.1} parent=1 // pred_region
      _
    $region17: #{reasoning_path_encoder_forward.1} parent=1 // pred_fallthru
      _
    %v18 = vld [vmem:[%s0] sm:$0xff]
    %v19 = vld [vmem:[%s0 + $0x8] sm:$0xff]
    %v20 = vld [vmem:[%s2] sm:$0x1]
    %v21 = vld [vmem:[%s2 + $0x1] sm:$0x1]
    %vm22 = vcmask 261120
    %v23 = vsel %vm22, %v18, 0.0
    %24 = vadd.xlane.f32.xlu0 %v23
    %v25 = vpop.xlane.xlu0 %24
    %v26 = vsel %vm22, %v19, 0.0
    %27 = vadd.xlane.f32.xlu0 %v26
    %v28 = vpop.xlane.xlu0 %27
    %v29 = vrcp.pop 32.0
    %v30 = vmul.f32 %v25, %v29
    %v31 = vmul.f32 %v28, %v29
    %v32 = vsub.f32 %v18, %v30
    %v33 = vsub.f32 %v19, %v31
    %v34 = vmul.f32 %v32, %v32
    %v35 = vmul.f32 %v33, %v33
    %v36 = vsel %vm22, %v34, 0.0
    %37 = vadd.xlane.f32.xlu0 %v36
    %v38 = vpop.xlane.xlu0 %37
    %v39 = vsel %vm22, %v35, 0.0
    %40 = vadd.xlane.f32.xlu0 %v39
    %v41 = vpop.xlane.xlu0 %40
    %v42 = vmul.f32 %v38, %v29
    %v43 = vmul.f32 %v41, %v29
    %v44 = vadd.f32 %v42, 1e-12
    %v45 = vadd.f32 %v43, 1e-12
    %v46 = vrsqrt.pop %v44
    %v47 = vrsqrt.pop %v45
    %v48 = vmul.f32 %v32, %v46
    %v49 = vmul.f32 %v33, %v47
    %v50 = vlaneseq
    %v51 = vshrl.u32 %v50, 7
    %v52 = vsub.s32 0, %v51
    %v53 = vrot.slane %v20, %v52
    %v54 = vmul.f32 %v48, %v53
    %v55 = vmul.f32 %v49, %v53
    %v56 = vlaneseq
    %v57 = vshrl.u32 %v56, 7
    %v58 = vsub.s32 0, %v57
    %v59 = vrot.slane %v21, %v58
    %v60 = vadd.f32 %v54, %v59
    %v61 = vadd.f32 %v55, %v59
    %v62 = vld [vmem:[%s3] sm:$0xff]
    %v63 = vld [vmem:[%s3 + $0x8] sm:$0xff]
    %v64 = vld [vmem:[%s3 + $0x10] sm:$0xff]
    %v65 = vld [vmem:[%s3 + $0x18] sm:$0xff]
    %v66 = vld [vmem:[%s2 + $0x2] sm:$0x1]
    %v67 = vlaneseq
    %v68 = vshrl.u32 %v67, 7
    %v69 = vsub.s32 0, %v68
    %v70 = vrot.slane %v66, %v69
    %v72 = vsel %vm22, %v60, 0
    %v75 = vsel %vm22, %v61, 0
    %77 = vmatprep.subr.mxu0 0.0
    %78 = vmatpush1.msra.mxu0 %v62
    %79 = vmatprep.subr.mxu0 0.0
    %80 = vmatpush1.msra.mxu0 %v63
    %81 = vmatprep.subr.mxu0 0.0
    %82 = vmatpush1.msra.mxu0 %v64
    %83 = vmatprep.subr.mxu0 0.0
    %84 = vmatpush1.msra.mxu0 %v65
    %85 = vmatprep.subr.mxu0 0.0
    %86 = vmatpush1.msra.mxu0 0.0
    %87 = vmatprep.subr.mxu0 0.0
    %88 = vmatpush1.msra.mxu0 0.0
    %89 = vmatprep.subr.mxu0 0.0
    %90 = vmatpush1.msra.mxu0 0.0
    %91 = vmatprep.subr.mxu0 0.0
    %92 = vmatpush1.msra.mxu0 0.0
    %93 = vmatprep.subr.mxu0 0.0
    %94 = vmatpush1.msra.mxu0 0.0
    %95 = vmatprep.subr.mxu0 0.0
    %96 = vmatpush1.msra.mxu0 0.0
    %97 = vmatprep.subr.mxu0 0.0
    %98 = vmatpush1.msra.mxu0 0.0
    %99 = vmatprep.subr.mxu0 0.0
    %100 = vmatpush1.msra.mxu0 0.0
    %101 = vmatprep.subr.mxu0 0.0
    %102 = vmatpush1.msra.mxu0 0.0
    %103 = vmatprep.subr.mxu0 0.0
    %104 = vmatpush1.msra.mxu0 0.0
    %105 = vmatprep.subr.mxu0 0.0
    %106 = vmatpush1.msra.mxu0 0.0
    %107 = vmatprep.subr.mxu0 0.0
    %108 = vmatpush1.msra.mxu0 0.0
    %109 = vmatprep.subr.mxu0 0.0
    %110 = vmatpush1.msra.mxu0 0.0
    %111 = vmatprep.subr.mxu0 0.0
    %112 = vmatpush1.msra.mxu0 0.0
    %113 = vmatprep.subr.mxu0 0.0
    %114 = vmatpush1.msra.mxu0 0.0
    %115 = vmatprep.subr.mxu0 0.0
    %116 = vmatpush1.msra.mxu0 0.0
    %117 = vmatprep.subr.mxu0 0.0
    %118 = vmatpush1.msra.mxu0 0.0
    %119 = vmatprep.subr.mxu0 0.0
    %120 = vmatpush1.msra.mxu0 0.0
    %121 = vmatprep.subr.mxu0 0.0
    %122 = vmatpush1.msra.mxu0 0.0
    %123 = vmatprep.subr.mxu0 0.0
    %124 = vmatpush1.msra.mxu0 0.0
    %125 = vmatprep.subr.mxu0 0.0
    %126 = vmatpush1.msra.mxu0 0.0
    %127 = vmatprep.subr.mxu0 0.0
    %128 = vmatpush1.msra.mxu0 0.0
    %129 = vmatprep.subr.mxu0 0.0
    %130 = vmatpush1.msra.mxu0 0.0
    %131 = vmatprep.subr.mxu0 0.0
    %132 = vmatpush1.msra.mxu0 0.0
    %133 = vmatprep.subr.mxu0 0.0
    %134 = vmatpush1.msra.mxu0 0.0
    %135 = vmatprep.subr.mxu0 0.0
    %136 = vmatpush1.msra.mxu0 0.0
    %137 = vmatprep.subr.mxu0 0.0
    %138 = vmatpush1.msra.mxu0 0.0
    %139 = vmatprep.subr.mxu0 0.0
    %140 = vmatpush1.msra.mxu0 0.0
    %141 = vmatprep.mubr.f32.mxu0 0.0
    %142 = vmatmul.mubr.f32.gmra.mrb[0].mxu0 %v72
    %v143 = vpop.f32.mrb[0].mxu0
    %v144 = vadd.f32 %v70, %v143
    %v145 = vpop.f32.mrb[0].mxu0
    %146 = vmatprep.mubr.f32.mxu0 0.0
    %147 = vmatmul.mubr.f32.gmra.mrb[0].mxu0 %v75
    %v148 = vpop.f32.mrb[0].mxu0
    %v149 = vadd.f32 %v70, %v148
    %v150 = vpop.f32.mrb[0].mxu0
    %151 = vdwg.mxu0
    %154 = vrot.lane.b32.xlu0 %v144, 120
    %v155 = vpop.permute.xlu0 %154
    %156 = vrot.lane.b32.xlu0 %v149, 120
    %v157 = vpop.permute.xlu0 %156
    %158 = vrot.lane.b32.xlu0 %v144, 112
    %v159 = vpop.permute.xlu0 %158
    %160 = vrot.lane.b32.xlu0 %v149, 112
    %v161 = vpop.permute.xlu0 %160
    %162 = vrot.lane.b32.xlu0 %v144, 104
    %v163 = vpop.permute.xlu0 %162
    %164 = vrot.lane.b32.xlu0 %v149, 104
    %v165 = vpop.permute.xlu0 %164
    %166 = vrot.lane.b32.xlu0 %v144, 96
    %v167 = vpop.permute.xlu0 %166
    %168 = vrot.lane.b32.xlu0 %v149, 96
    %v169 = vpop.permute.xlu0 %168
    %vm170 = vcmask 64512
    %v171 = vsel %vm170, %v144, 0
    %v173 = vsel %vm170, %v149, 0
    %v175 = vsel %vm170, %v167, 0
    %v177 = vsel %vm170, %v169, 0
    %179 = vmatprep.subr.mxu0 0.0
    %180 = vmatpush1.xpose.msra.mxu0 %v175
    %181 = vmatprep.subr.mxu0 0.0
    %182 = vmatpush1.xpose.msra.mxu0 %v177
    %183 = vmatprep.subr.mxu0 0.0
    %184 = vmatpush1.xpose.msra.mxu0 0.0
    %185 = vmatprep.subr.mxu0 0.0
    %186 = vmatpush1.xpose.msra.mxu0 0.0
    %187 = vmatprep.subr.mxu0 0.0
    %188 = vmatpush1.xpose.msra.mxu0 0.0
    %189 = vmatprep.subr.mxu0 0.0
    %190 = vmatpush1.xpose.msra.mxu0 0.0
    %191 = vmatprep.subr.mxu0 0.0
    %192 = vmatpush1.xpose.msra.mxu0 0.0
    %193 = vmatprep.subr.mxu0 0.0
    %194 = vmatpush1.xpose.msra.mxu0 0.0
    %195 = vmatprep.subr.mxu0 0.0
    %196 = vmatpush1.xpose.msra.mxu0 0.0
    %197 = vmatprep.subr.mxu0 0.0
    %198 = vmatpush1.xpose.msra.mxu0 0.0
    %199 = vmatprep.subr.mxu0 0.0
    %200 = vmatpush1.xpose.msra.mxu0 0.0
    %201 = vmatprep.subr.mxu0 0.0
    %202 = vmatpush1.xpose.msra.mxu0 0.0
    %203 = vmatprep.subr.mxu0 0.0
    %204 = vmatpush1.xpose.msra.mxu0 0.0
    %205 = vmatprep.subr.mxu0 0.0
    %206 = vmatpush1.xpose.msra.mxu0 0.0
    %207 = vmatprep.subr.mxu0 0.0
    %208 = vmatpush1.xpose.msra.mxu0 0.0
    %209 = vmatprep.subr.mxu0 0.0
    %210 = vmatpush1.xpose.msra.mxu0 0.0
    %211 = vmatprep.subr.mxu0 0.0
    %212 = vmatpush1.xpose.msra.mxu0 0.0
    %213 = vmatprep.subr.mxu0 0.0
    %214 = vmatpush1.xpose.msra.mxu0 0.0
    %215 = vmatprep.subr.mxu0 0.0
    %216 = vmatpush1.xpose.msra.mxu0 0.0
    %217 = vmatprep.subr.mxu0 0.0
    %218 = vmatpush1.xpose.msra.mxu0 0.0
    %219 = vmatprep.subr.mxu0 0.0
    %220 = vmatpush1.xpose.msra.mxu0 0.0
    %221 = vmatprep.subr.mxu0 0.0
    %222 = vmatpush1.xpose.msra.mxu0 0.0
    %223 = vmatprep.subr.mxu0 0.0
    %224 = vmatpush1.xpose.msra.mxu0 0.0
    %225 = vmatprep.subr.mxu0 0.0
    %226 = vmatpush1.xpose.msra.mxu0 0.0
    %227 = vmatprep.subr.mxu0 0.0
    %228 = vmatpush1.xpose.msra.mxu0 0.0
    %229 = vmatprep.subr.mxu0 0.0
    %230 = vmatpush1.xpose.msra.mxu0 0.0
    %231 = vmatprep.subr.mxu0 0.0
    %232 = vmatpush1.xpose.msra.mxu0 0.0
    %233 = vmatprep.subr.mxu0 0.0
    %234 = vmatpush1.xpose.msra.mxu0 0.0
    %235 = vmatprep.subr.mxu0 0.0
    %236 = vmatpush1.xpose.msra.mxu0 0.0
    %237 = vmatprep.subr.mxu0 0.0
    %238 = vmatpush1.xpose.msra.mxu0 0.0
    %239 = vmatprep.subr.mxu0 0.0
    %240 = vmatpush1.xpose.msra.mxu0 0.0
    %241 = vmatprep.subr.mxu0 0.0
    %242 = vmatpush1.xpose.msra.mxu0 0.0
    %243 = vmatprep.mubr.f32.mxu0 0.0
    %244 = vmatmul.mubr.f32.gmra.mrb[0].mxu0 %v171
    %v245 = vpop.f32.mrb[0].mxu0
    %v246 = vadd.f32 0.0, %v245
    %v247 = vpop.f32.mrb[0].mxu0
    %248 = vmatprep.mubr.f32.mxu0 0.0
    %249 = vmatmul.mubr.f32.gmra.mrb[0].mxu0 %v173
    %v250 = vpop.f32.mrb[0].mxu0
    %v251 = vadd.f32 0.0, %v250
    %v252 = vpop.f32.mrb[0].mxu0
    %253 = vdwg.mxu0
    %254 = vrot.lane.b32.xlu0 %v155, 96
    %v255 = vpop.permute.xlu0 %254
    %256 = vrot.lane.b32.xlu0 %v157, 96
    %v257 = vpop.permute.xlu0 %256
    %v258 = vsel %vm170, %v155, 0
    %v260 = vsel %vm170, %v157, 0
    %v262 = vsel %vm170, %v255, 0
    %v264 = vsel %vm170, %v257, 0
    %266 = vmatprep.subr.mxu0 0.0
    %267 = vmatpush1.xpose.msra.mxu0 %v262
    %268 = vmatprep.subr.mxu0 0.0
    %269 = vmatpush1.xpose.msra.mxu0 %v264
    %270 = vmatprep.subr.mxu0 0.0
    %271 = vmatpush1.xpose.msra.mxu0 0.0
    %272 = vmatprep.subr.mxu0 0.0
    %273 = vmatpush1.xpose.msra.mxu0 0.0
    %274 = vmatprep.subr.mxu0 0.0
    %275 = vmatpush1.xpose.msra.mxu0 0.0
    %276 = vmatprep.subr.mxu0 0.0
    %277 = vmatpush1.xpose.msra.mxu0 0.0
    %278 = vmatprep.subr.mxu0 0.0
    %279 = vmatpush1.xpose.msra.mxu0 0.0
    %280 = vmatprep.subr.mxu0 0.0
    %281 = vmatpush1.xpose.msra.mxu0 0.0
    %282 = vmatprep.subr.mxu0 0.0
    %283 = vmatpush1.xpose.msra.mxu0 0.0
    %284 = vmatprep.subr.mxu0 0.0
    %285 = vmatpush1.xpose.msra.mxu0 0.0
    %286 = vmatprep.subr.mxu0 0.0
    %287 = vmatpush1.xpose.msra.mxu0 0.0
    %288 = vmatprep.subr.mxu0 0.0
    %289 = vmatpush1.xpose.msra.mxu0 0.0
    %290 = vmatprep.subr.mxu0 0.0
    %291 = vmatpush1.xpose.msra.mxu0 0.0
    %292 = vmatprep.subr.mxu0 0.0
    %293 = vmatpush1.xpose.msra.mxu0 0.0
    %294 = vmatprep.subr.mxu0 0.0
    %295 = vmatpush1.xpose.msra.mxu0 0.0
    %296 = vmatprep.subr.mxu0 0.0
    %297 = vmatpush1.xpose.msra.mxu0 0.0
    %298 = vmatprep.subr.mxu0 0.0
    %299 = vmatpush1.xpose.msra.mxu0 0.0
    %300 = vmatprep.subr.mxu0 0.0
    %301 = vmatpush1.xpose.msra.mxu0 0.0
    %302 = vmatprep.subr.mxu0 0.0
    %303 = vmatpush1.xpose.msra.mxu0 0.0
    %304 = vmatprep.subr.mxu0 0.0
    %305 = vmatpush1.xpose.msra.mxu0 0.0
    %306 = vmatprep.subr.mxu0 0.0
    %307 = vmatpush1.xpose.msra.mxu0 0.0
    %308 = vmatprep.subr.mxu0 0.0
    %309 = vmatpush1.xpose.msra.mxu0 0.0
    %310 = vmatprep.subr.mxu0 0.0
    %311 = vmatpush1.xpose.msra.mxu0 0.0
    %312 = vmatprep.subr.mxu0 0.0
    %313 = vmatpush1.xpose.msra.mxu0 0.0
    %314 = vmatprep.subr.mxu0 0.0
    %315 = vmatpush1.xpose.msra.mxu0 0.0
    %316 = vmatprep.subr.mxu0 0.0
    %317 = vmatpush1.xpose.msra.mxu0 0.0
    %318 = vmatprep.subr.mxu0 0.0
    %319 = vmatpush1.xpose.msra.mxu0 0.0
    %320 = vmatprep.subr.mxu0 0.0
    %321 = vmatpush1.xpose.msra.mxu0 0.0
    %322 = vmatprep.subr.mxu0 0.0
    %323 = vmatpush1.xpose.msra.mxu0 0.0
    %324 = vmatprep.subr.mxu0 0.0
    %325 = vmatpush1.xpose.msra.mxu0 0.0
    %326 = vmatprep.subr.mxu0 0.0
    %327 = vmatpush1.xpose.msra.mxu0 0.0
    %328 = vmatprep.subr.mxu0 0.0
    %329 = vmatpush1.xpose.msra.mxu0 0.0
    %330 = vmatprep.mubr.f32.mxu0 0.0
    %331 = vmatmul.mubr.f32.gmra.mrb[0].mxu0 %v258
    %v332 = vpop.f32.mrb[0].mxu0
    %v333 = vadd.f32 0.0, %v332
    %v334 = vpop.f32.mrb[0].mxu0
    %335 = vmatprep.mubr.f32.mxu0 0.0
    %336 = vmatmul.mubr.f32.gmra.mrb[0].mxu0 %v260
    %v337 = vpop.f32.mrb[0].mxu0
    %v338 = vadd.f32 0.0, %v337
    %v339 = vpop.f32.mrb[0].mxu0
    %340 = vdwg.mxu0
    %341 = vrot.lane.b32.xlu0 %v159, 96
    %v342 = vpop.permute.xlu0 %341
    %343 = vrot.lane.b32.xlu0 %v161, 96
    %v344 = vpop.permute.xlu0 %343
    %v345 = vsel %vm170, %v159, 0
    %v347 = vsel %vm170, %v161, 0
    %v349 = vsel %vm170, %v342, 0
    %v351 = vsel %vm170, %v344, 0
    %353 = vmatprep.subr.mxu0 0.0
    %354 = vmatpush1.xpose.msra.mxu0 %v349
    %355 = vmatprep.subr.mxu0 0.0
    %356 = vmatpush1.xpose.msra.mxu0 %v351
    %357 = vmatprep.subr.mxu0 0.0
    %358 = vmatpush1.xpose.msra.mxu0 0.0
    %359 = vmatprep.subr.mxu0 0.0
    %360 = vmatpush1.xpose.msra.mxu0 0.0
    %361 = vmatprep.subr.mxu0 0.0
    %362 = vmatpush1.xpose.msra.mxu0 0.0
    %363 = vmatprep.subr.mxu0 0.0
    %364 = vmatpush1.xpose.msra.mxu0 0.0
    %365 = vmatprep.subr.mxu0 0.0
    %366 = vmatpush1.xpose.msra.mxu0 0.0
    %367 = vmatprep.subr.mxu0 0.0
    %368 = vmatpush1.xpose.msra.mxu0 0.0
    %369 = vmatprep.subr.mxu0 0.0
    %370 = vmatpush1.xpose.msra.mxu0 0.0
    %371 = vmatprep.subr.mxu0 0.0
    %372 = vmatpush1.xpose.msra.mxu0 0.0
    %373 = vmatprep.subr.mxu0 0.0
    %374 = vmatpush1.xpose.msra.mxu0 0.0
    %375 = vmatprep.subr.mxu0 0.0
    %376 = vmatpush1.xpose.msra.mxu0 0.0
    %377 = vmatprep.subr.mxu0 0.0
    %378 = vmatpush1.xpose.msra.mxu0 0.0
    %379 = vmatprep.subr.mxu0 0.0
    %380 = vmatpush1.xpose.msra.mxu0 0.0
    %381 = vmatprep.subr.mxu0 0.0
    %382 = vmatpush1.xpose.msra.mxu0 0.0
    %383 = vmatprep.subr.mxu0 0.0
    %384 = vmatpush1.xpose.msra.mxu0 0.0
    %385 = vmatprep.subr.mxu0 0.0
    %386 = vmatpush1.xpose.msra.mxu0 0.0
    %387 = vmatprep.subr.mxu0 0.0
    %388 = vmatpush1.xpose.msra.mxu0 0.0
    %389 = vmatprep.subr.mxu0 0.0
    %390 = vmatpush1.xpose.msra.mxu0 0.0
    %391 = vmatprep.subr.mxu0 0.0
    %392 = vmatpush1.xpose.msra.mxu0 0.0
    %393 = vmatprep.subr.mxu0 0.0
    %394 = vmatpush1.xpose.msra.mxu0 0.0
    %395 = vmatprep.subr.mxu0 0.0
    %396 = vmatpush1.xpose.msra.mxu0 0.0
    %397 = vmatprep.subr.mxu0 0.0
    %398 = vmatpush1.xpose.msra.mxu0 0.0
    %399 = vmatprep.subr.mxu0 0.0
    %400 = vmatpush1.xpose.msra.mxu0 0.0
    %401 = vmatprep.subr.mxu0 0.0
    %402 = vmatpush1.xpose.msra.mxu0 0.0
    %403 = vmatprep.subr.mxu0 0.0
    %404 = vmatpush1.xpose.msra.mxu0 0.0
    %405 = vmatprep.subr.mxu0 0.0
    %406 = vmatpush1.xpose.msra.mxu0 0.0
    %407 = vmatprep.subr.mxu0 0.0
    %408 = vmatpush1.xpose.msra.mxu0 0.0
    %409 = vmatprep.subr.mxu0 0.0
    %410 = vmatpush1.xpose.msra.mxu0 0.0
    %411 = vmatprep.subr.mxu0 0.0
    %412 = vmatpush1.xpose.msra.mxu0 0.0
    %413 = vmatprep.subr.mxu0 0.0
    %414 = vmatpush1.xpose.msra.mxu0 0.0
    %415 = vmatprep.subr.mxu0 0.0
    %416 = vmatpush1.xpose.msra.mxu0 0.0
    %417 = vmatprep.mubr.f32.mxu0 0.0
    %418 = vmatmul.mubr.f32.gmra.mrb[0].mxu0 %v345
    %v419 = vpop.f32.mrb[0].mxu0
    %v420 = vadd.f32 0.0, %v419
    %v421 = vpop.f32.mrb[0].mxu0
    %422 = vmatprep.mubr.f32.mxu0 0.0
    %423 = vmatmul.mubr.f32.gmra.mrb[0].mxu0 %v347
    %v424 = vpop.f32.mrb[0].mxu0
    %v425 = vadd.f32 0.0, %v424
    %v426 = vpop.f32.mrb[0].mxu0
    %427 = vdwg.mxu0
    %428 = vrot.lane.b32.xlu0 %v163, 96
    %v429 = vpop.permute.xlu0 %428
    %430 = vrot.lane.b32.xlu0 %v165, 96
    %v431 = vpop.permute.xlu0 %430
    %v432 = vsel %vm170, %v163, 0
    %v434 = vsel %vm170, %v165, 0
    %v436 = vsel %vm170, %v429, 0
    %v438 = vsel %vm170, %v431, 0
    %440 = vmatprep.subr.mxu0 0.0
    %441 = vmatpush1.xpose.msra.mxu0 %v436
    %442 = vmatprep.subr.mxu0 0.0
    %443 = vmatpush1.xpose.msra.mxu0 %v438
    %444 = vmatprep.subr.mxu0 0.0
    %445 = vmatpush1.xpose.msra.mxu0 0.0
    %446 = vmatprep.subr.mxu0 0.0
    %447 = vmatpush1.xpose.msra.mxu0 0.0
    %448 = vmatprep.subr.mxu0 0.0
    %449 = vmatpush1.xpose.msra.mxu0 0.0
    %450 = vmatprep.subr.mxu0 0.0
    %451 = vmatpush1.xpose.msra.mxu0 0.0
    %452 = vmatprep.subr.mxu0 0.0
    %453 = vmatpush1.xpose.msra.mxu0 0.0
    %454 = vmatprep.subr.mxu0 0.0
    %455 = vmatpush1.xpose.msra.mxu0 0.0
    %456 = vmatprep.subr.mxu0 0.0
    %457 = vmatpush1.xpose.msra.mxu0 0.0
    %458 = vmatprep.subr.mxu0 0.0
    %459 = vmatpush1.xpose.msra.mxu0 0.0
    %460 = vmatprep.subr.mxu0 0.0
    %461 = vmatpush1.xpose.msra.mxu0 0.0
    %462 = vmatprep.subr.mxu0 0.0
    %463 = vmatpush1.xpose.msra.mxu0 0.0
    %464 = vmatprep.subr.mxu0 0.0
    %465 = vmatpush1.xpose.msra.mxu0 0.0
    %466 = vmatprep.subr.mxu0 0.0
    %467 = vmatpush1.xpose.msra.mxu0 0.0
    %468 = vmatprep.subr.mxu0 0.0
    %469 = vmatpush1.xpose.msra.mxu0 0.0
    %470 = vmatprep.subr.mxu0 0.0
    %471 = vmatpush1.xpose.msra.mxu0 0.0
    %472 = vmatprep.subr.mxu0 0.0
    %473 = vmatpush1.xpose.msra.mxu0 0.0
    %474 = vmatprep.subr.mxu0 0.0
    %475 = vmatpush1.xpose.msra.mxu0 0.0
    %476 = vmatprep.subr.mxu0 0.0
    %477 = vmatpush1.xpose.msra.mxu0 0.0
    %478 = vmatprep.subr.mxu0 0.0
    %479 = vmatpush1.xpose.msra.mxu0 0.0
    %480 = vmatprep.subr.mxu0 0.0
    %481 = vmatpush1.xpose.msra.mxu0 0.0
    %482 = vmatprep.subr.mxu0 0.0
    %483 = vmatpush1.xpose.msra.mxu0 0.0
    %484 = vmatprep.subr.mxu0 0.0
    %485 = vmatpush1.xpose.msra.mxu0 0.0
    %486 = vmatprep.subr.mxu0 0.0
    %487 = vmatpush1.xpose.msra.mxu0 0.0
    %488 = vmatprep.subr.mxu0 0.0
    %489 = vmatpush1.xpose.msra.mxu0 0.0
    %490 = vmatprep.subr.mxu0 0.0
    %491 = vmatpush1.xpose.msra.mxu0 0.0
    %492 = vmatprep.subr.mxu0 0.0
    %493 = vmatpush1.xpose.msra.mxu0 0.0
    %494 = vmatprep.subr.mxu0 0.0
    %495 = vmatpush1.xpose.msra.mxu0 0.0
    %496 = vmatprep.subr.mxu0 0.0
    %497 = vmatpush1.xpose.msra.mxu0 0.0
    %498 = vmatprep.subr.mxu0 0.0
    %499 = vmatpush1.xpose.msra.mxu0 0.0
    %500 = vmatprep.subr.mxu0 0.0
    %501 = vmatpush1.xpose.msra.mxu0 0.0
    %502 = vmatprep.subr.mxu0 0.0
    %503 = vmatpush1.xpose.msra.mxu0 0.0
    %504 = vmatprep.mubr.f32.mxu0 0.0
    %505 = vmatmul.mubr.f32.gmra.mrb[0].mxu0 %v432
    %v506 = vpop.f32.mrb[0].mxu0
    %v507 = vadd.f32 0.0, %v506
    %v508 = vpop.f32.mrb[0].mxu0
    %509 = vmatprep.mubr.f32.mxu0 0.0
    %510 = vmatmul.mubr.f32.gmra.mrb[0].mxu0 %v434
    %v511 = vpop.f32.mrb[0].mxu0
    %v512 = vadd.f32 0.0, %v511
    %v513 = vpop.f32.mrb[0].mxu0
    %514 = vdwg.mxu0
    %v515 = vmul.f32 %v246, 0.35355338
    %v516 = vmul.f32 %v251, 0.35355338
    %v517 = vmul.f32 %v333, 0.35355338
    %v518 = vmul.f32 %v338, 0.35355338
    %v519 = vmul.f32 %v420, 0.35355338
    %v520 = vmul.f32 %v425, 0.35355338
    %v521 = vmul.f32 %v507, 0.35355338
    %v522 = vmul.f32 %v512, 0.35355338
    %v523 = vld [vmem:[%s1] sm:$0xff]
    %v524 = vld [vmem:[%s1 + $0x8] sm:$0xff]
    %v525 = vadd.f32 %v515, %v523
    %v526 = vadd.f32 %v516, %v524
    %v527 = vadd.f32 %v517, %v523
    %v528 = vadd.f32 %v518, %v524
    %v529 = vadd.f32 %v519, %v523
    %v530 = vadd.f32 %v520, %v524
    %v531 = vadd.f32 %v521, %v523
    %v532 = vadd.f32 %v522, %v524
    %vm533 = vcmask 130048
    %v534 = vsel %vm533, %v525, -inf
    %535 = vmax.xlane.f32.xlu0 %v534
    %v536 = vpop.xlane.xlu0 %535
    %v537 = vsel %vm533, %v526, -inf
    %538 = vmax.xlane.f32.xlu0 %v537
    %v539 = vpop.xlane.xlu0 %538
    %v540 = vsel %vm533, %v527, -inf
    %541 = vmax.xlane.f32.xlu0 %v540
    %v542 = vpop.xlane.xlu0 %541
    %v543 = vsel %vm533, %v528, -inf
    %544 = vmax.xlane.f32.xlu0 %v543
    %v545 = vpop.xlane.xlu0 %544
    %v546 = vsel %vm533, %v529, -inf
    %547 = vmax.xlane.f32.xlu0 %v546
    %v548 = vpop.xlane.xlu0 %547
    %v549 = vsel %vm533, %v530, -inf
    %550 = vmax.xlane.f32.xlu0 %v549
    %v551 = vpop.xlane.xlu0 %550
    %v552 = vsel %vm533, %v531, -inf
    %553 = vmax.xlane.f32.xlu0 %v552
    %v554 = vpop.xlane.xlu0 %553
    %v555 = vsel %vm533, %v532, -inf
    %556 = vmax.xlane.f32.xlu0 %v555
    %v557 = vpop.xlane.xlu0 %556
    %v558 = vsub.f32 %v525, %v536
    %v559 = vsub.f32 %v526, %v539
    %v560 = vsub.f32 %v527, %v542
    %v561 = vsub.f32 %v528, %v545
    %v562 = vsub.f32 %v529, %v548
    %v563 = vsub.f32 %v530, %v551
    %v564 = vsub.f32 %v531, %v554
    %v565 = vsub.f32 %v532, %v557
    %v566 = vmul.f32 %v558, 1.442695
    %v567 = vpow.pop %v566
    %v568 = vmul.f32 %v559, 1.442695
    %v569 = vpow.pop %v568
    %v570 = vmul.f32 %v560, 1.442695
    %v571 = vpow.pop %v570
    %v572 = vmul.f32 %v561, 1.442695
    %v573 = vpow.pop %v572
    %v574 = vmul.f32 %v562, 1.442695
    %v575 = vpow.pop %v574
    %v576 = vmul.f32 %v563, 1.442695
    %v577 = vpow.pop %v576
    %v578 = vmul.f32 %v564, 1.442695
    %v579 = vpow.pop %v578
    %v580 = vmul.f32 %v565, 1.442695
    %v581 = vpow.pop %v580
    %v582 = vsel %vm533, %v567, 0.0
    %583 = vadd.xlane.f32.xlu0 %v582
    %v584 = vpop.xlane.xlu0 %583
    %v585 = vsel %vm533, %v569, 0.0
    %586 = vadd.xlane.f32.xlu0 %v585
    %v587 = vpop.xlane.xlu0 %586
    %v588 = vsel %vm533, %v571, 0.0
    %589 = vadd.xlane.f32.xlu0 %v588
    %v590 = vpop.xlane.xlu0 %589
    %v591 = vsel %vm533, %v573, 0.0
    %592 = vadd.xlane.f32.xlu0 %v591
    %v593 = vpop.xlane.xlu0 %592
    %v594 = vsel %vm533, %v575, 0.0
    %595 = vadd.xlane.f32.xlu0 %v594
    %v596 = vpop.xlane.xlu0 %595
    %v597 = vsel %vm533, %v577, 0.0
    %598 = vadd.xlane.f32.xlu0 %v597
    %v599 = vpop.xlane.xlu0 %598
    %v600 = vsel %vm533, %v579, 0.0
    %601 = vadd.xlane.f32.xlu0 %v600
    %v602 = vpop.xlane.xlu0 %601
    %v603 = vsel %vm533, %v581, 0.0
    %604 = vadd.xlane.f32.xlu0 %v603
    %v605 = vpop.xlane.xlu0 %604
    %v606 = vrcp.pop %v584
    %v607 = vrcp.pop %v587
    %v608 = vrcp.pop %v590
    %v609 = vrcp.pop %v593
    %v610 = vrcp.pop %v596
    %v611 = vrcp.pop %v599
    %v612 = vrcp.pop %v602
    %v613 = vrcp.pop %v605
    %v614 = vmul.f32 %v567, %v606
    %v615 = vmul.f32 %v569, %v607
    %v616 = vmul.f32 %v571, %v608
    %v617 = vmul.f32 %v573, %v609
    %v618 = vmul.f32 %v575, %v610
    %v619 = vmul.f32 %v577, %v611
    %v620 = vmul.f32 %v579, %v612
    %v621 = vmul.f32 %v581, %v613
    %622 = vrot.lane.b32.xlu0 %v144, 64
    %v623 = vpop.permute.xlu0 %622
    %624 = vrot.lane.b32.xlu0 %v149, 64
    %v625 = vpop.permute.xlu0 %624
    %v629 = vsel %vm533, %v614, 0
    %v632 = vsel %vm533, %v615, 0
    %634 = vmatprep.subr.mxu0 0.0
    %635 = vmatpush1.msra.mxu0 %v623
    %636 = vmatprep.subr.mxu0 0.0
    %637 = vmatpush1.msra.mxu0 %v625
    %638 = vmatprep.subr.mxu0 0.0
    %639 = vmatpush1.msra.mxu0 0.0
    %640 = vmatprep.subr.mxu0 0.0
    %641 = vmatpush1.msra.mxu0 0.0
    %642 = vmatprep.subr.mxu0 0.0
    %643 = vmatpush1.msra.mxu0 0.0
    %644 = vmatprep.subr.mxu0 0.0
    %645 = vmatpush1.msra.mxu0 0.0
    %646 = vmatprep.subr.mxu0 0.0
    %647 = vmatpush1.msra.mxu0 0.0
    %648 = vmatprep.subr.mxu0 0.0
    %649 = vmatpush1.msra.mxu0 0.0
    %650 = vmatprep.subr.mxu0 0.0
    %651 = vmatpush1.msra.mxu0 0.0
    %652 = vmatprep.subr.mxu0 0.0
    %653 = vmatpush1.msra.mxu0 0.0
    %654 = vmatprep.subr.mxu0 0.0
    %655 = vmatpush1.msra.mxu0 0.0
    %656 = vmatprep.subr.mxu0 0.0
    %657 = vmatpush1.msra.mxu0 0.0
    %658 = vmatprep.subr.mxu0 0.0
    %659 = vmatpush1.msra.mxu0 0.0
    %660 = vmatprep.subr.mxu0 0.0
    %661 = vmatpush1.msra.mxu0 0.0
    %662 = vmatprep.subr.mxu0 0.0
    %663 = vmatpush1.msra.mxu0 0.0
    %664 = vmatprep.subr.mxu0 0.0
    %665 = vmatpush1.msra.mxu0 0.0
    %666 = vmatprep.subr.mxu0 0.0
    %667 = vmatpush1.msra.mxu0 0.0
    %668 = vmatprep.subr.mxu0 0.0
    %669 = vmatpush1.msra.mxu0 0.0
    %670 = vmatprep.subr.mxu0 0.0
    %671 = vmatpush1.msra.mxu0 0.0
    %672 = vmatprep.subr.mxu0 0.0
    %673 = vmatpush1.msra.mxu0 0.0
    %674 = vmatprep.subr.mxu0 0.0
    %675 = vmatpush1.msra.mxu0 0.0
    %676 = vmatprep.subr.mxu0 0.0
    %677 = vmatpush1.msra.mxu0 0.0
    %678 = vmatprep.subr.mxu0 0.0
    %679 = vmatpush1.msra.mxu0 0.0
    %680 = vmatprep.subr.mxu0 0.0
    %681 = vmatpush1.msra.mxu0 0.0
    %682 = vmatprep.subr.mxu0 0.0
    %683 = vmatpush1.msra.mxu0 0.0
    %684 = vmatprep.subr.mxu0 0.0
    %685 = vmatpush1.msra.mxu0 0.0
    %686 = vmatprep.subr.mxu0 0.0
    %687 = vmatpush1.msra.mxu0 0.0
    %688 = vmatprep.subr.mxu0 0.0
    %689 = vmatpush1.msra.mxu0 0.0
    %690 = vmatprep.subr.mxu0 0.0
    %691 = vmatpush1.msra.mxu0 0.0
    %692 = vmatprep.subr.mxu0 0.0
    %693 = vmatpush1.msra.mxu0 0.0
    %694 = vmatprep.subr.mxu0 0.0
    %695 = vmatpush1.msra.mxu0 0.0
    %696 = vmatprep.subr.mxu0 0.0
    %697 = vmatpush1.msra.mxu0 0.0
    %698 = vmatprep.mubr.f32.mxu0 0.0
    %699 = vmatmul.mubr.f32.gmra.mrb[0].mxu0 %v629
    %v700 = vpop.f32.mrb[0].mxu0
    %v701 = vadd.f32 0.0, %v700
    %v702 = vpop.f32.mrb[0].mxu0
    %703 = vmatprep.mubr.f32.mxu0 0.0
    %704 = vmatmul.mubr.f32.gmra.mrb[0].mxu0 %v632
    %v705 = vpop.f32.mrb[0].mxu0
    %v706 = vadd.f32 0.0, %v705
    %v707 = vpop.f32.mrb[0].mxu0
    %708 = vdwg.mxu0
    %709 = vrot.lane.b32.xlu0 %v155, 64
    %v710 = vpop.permute.xlu0 %709
    %711 = vrot.lane.b32.xlu0 %v157, 64
    %v712 = vpop.permute.xlu0 %711
    %v716 = vsel %vm533, %v616, 0
    %v719 = vsel %vm533, %v617, 0
    %721 = vmatprep.subr.mxu0 0.0
    %722 = vmatpush1.msra.mxu0 %v710
    %723 = vmatprep.subr.mxu0 0.0
    %724 = vmatpush1.msra.mxu0 %v712
    %725 = vmatprep.subr.mxu0 0.0
    %726 = vmatpush1.msra.mxu0 0.0
    %727 = vmatprep.subr.mxu0 0.0
    %728 = vmatpush1.msra.mxu0 0.0
    %729 = vmatprep.subr.mxu0 0.0
    %730 = vmatpush1.msra.mxu0 0.0
    %731 = vmatprep.subr.mxu0 0.0
    %732 = vmatpush1.msra.mxu0 0.0
    %733 = vmatprep.subr.mxu0 0.0
    %734 = vmatpush1.msra.mxu0 0.0
    %735 = vmatprep.subr.mxu0 0.0
    %736 = vmatpush1.msra.mxu0 0.0
    %737 = vmatprep.subr.mxu0 0.0
    %738 = vmatpush1.msra.mxu0 0.0
    %739 = vmatprep.subr.mxu0 0.0
    %740 = vmatpush1.msra.mxu0 0.0
    %741 = vmatprep.subr.mxu0 0.0
    %742 = vmatpush1.msra.mxu0 0.0
    %743 = vmatprep.subr.mxu0 0.0
    %744 = vmatpush1.msra.mxu0 0.0
    %745 = vmatprep.subr.mxu0 0.0
    %746 = vmatpush1.msra.mxu0 0.0
    %747 = vmatprep.subr.mxu0 0.0
    %748 = vmatpush1.msra.mxu0 0.0
    %749 = vmatprep.subr.mxu0 0.0
    %750 = vmatpush1.msra.mxu0 0.0
    %751 = vmatprep.subr.mxu0 0.0
    %752 = vmatpush1.msra.mxu0 0.0
    %753 = vmatprep.subr.mxu0 0.0
    %754 = vmatpush1.msra.mxu0 0.0
    %755 = vmatprep.subr.mxu0 0.0
    %756 = vmatpush1.msra.mxu0 0.0
    %757 = vmatprep.subr.mxu0 0.0
    %758 = vmatpush1.msra.mxu0 0.0
    %759 = vmatprep.subr.mxu0 0.0
    %760 = vmatpush1.msra.mxu0 0.0
    %761 = vmatprep.subr.mxu0 0.0
    %762 = vmatpush1.msra.mxu0 0.0
    %763 = vmatprep.subr.mxu0 0.0
    %764 = vmatpush1.msra.mxu0 0.0
    %765 = vmatprep.subr.mxu0 0.0
    %766 = vmatpush1.msra.mxu0 0.0
    %767 = vmatprep.subr.mxu0 0.0
    %768 = vmatpush1.msra.mxu0 0.0
    %769 = vmatprep.subr.mxu0 0.0
    %770 = vmatpush1.msra.mxu0 0.0
    %771 = vmatprep.subr.mxu0 0.0
    %772 = vmatpush1.msra.mxu0 0.0
    %773 = vmatprep.subr.mxu0 0.0
    %774 = vmatpush1.msra.mxu0 0.0
    %775 = vmatprep.subr.mxu0 0.0
    %776 = vmatpush1.msra.mxu0 0.0
    %777 = vmatprep.subr.mxu0 0.0
    %778 = vmatpush1.msra.mxu0 0.0
    %779 = vmatprep.subr.mxu0 0.0
    %780 = vmatpush1.msra.mxu0 0.0
    %781 = vmatprep.subr.mxu0 0.0
    %782 = vmatpush1.msra.mxu0 0.0
    %783 = vmatprep.subr.mxu0 0.0
    %784 = vmatpush1.msra.mxu0 0.0
    %785 = vmatprep.mubr.f32.mxu0 0.0
    %786 = vmatmul.mubr.f32.gmra.mrb[0].mxu0 %v716
    %v787 = vpop.f32.mrb[0].mxu0
    %v788 = vadd.f32 0.0, %v787
    %v789 = vpop.f32.mrb[0].mxu0
    %790 = vmatprep.mubr.f32.mxu0 0.0
    %791 = vmatmul.mubr.f32.gmra.mrb[0].mxu0 %v719
    %v792 = vpop.f32.mrb[0].mxu0
    %v793 = vadd.f32 0.0, %v792
    %v794 = vpop.f32.mrb[0].mxu0
    %795 = vdwg.mxu0
    %796 = vrot.lane.b32.xlu0 %v159, 64
    %v797 = vpop.permute.xlu0 %796
    %798 = vrot.lane.b32.xlu0 %v161, 64
    %v799 = vpop.permute.xlu0 %798
    %v803 = vsel %vm533, %v618, 0
    %v806 = vsel %vm533, %v619, 0
    %808 = vmatprep.subr.mxu0 0.0
    %809 = vmatpush1.msra.mxu0 %v797
    %810 = vmatprep.subr.mxu0 0.0
    %811 = vmatpush1.msra.mxu0 %v799
    %812 = vmatprep.subr.mxu0 0.0
    %813 = vmatpush1.msra.mxu0 0.0
    %814 = vmatprep.subr.mxu0 0.0
    %815 = vmatpush1.msra.mxu0 0.0
    %816 = vmatprep.subr.mxu0 0.0
    %817 = vmatpush1.msra.mxu0 0.0
    %818 = vmatprep.subr.mxu0 0.0
    %819 = vmatpush1.msra.mxu0 0.0
    %820 = vmatprep.subr.mxu0 0.0
    %821 = vmatpush1.msra.mxu0 0.0
    %822 = vmatprep.subr.mxu0 0.0
    %823 = vmatpush1.msra.mxu0 0.0
    %824 = vmatprep.subr.mxu0 0.0
    %825 = vmatpush1.msra.mxu0 0.0
    %826 = vmatprep.subr.mxu0 0.0
    %827 = vmatpush1.msra.mxu0 0.0
    %828 = vmatprep.subr.mxu0 0.0
    %829 = vmatpush1.msra.mxu0 0.0
    %830 = vmatprep.subr.mxu0 0.0
    %831 = vmatpush1.msra.mxu0 0.0
    %832 = vmatprep.subr.mxu0 0.0
    %833 = vmatpush1.msra.mxu0 0.0
    %834 = vmatprep.subr.mxu0 0.0
    %835 = vmatpush1.msra.mxu0 0.0
    %836 = vmatprep.subr.mxu0 0.0
    %837 = vmatpush1.msra.mxu0 0.0
    %838 = vmatprep.subr.mxu0 0.0
    %839 = vmatpush1.msra.mxu0 0.0
    %840 = vmatprep.subr.mxu0 0.0
    %841 = vmatpush1.msra.mxu0 0.0
    %842 = vmatprep.subr.mxu0 0.0
    %843 = vmatpush1.msra.mxu0 0.0
    %844 = vmatprep.subr.mxu0 0.0
    %845 = vmatpush1.msra.mxu0 0.0
    %846 = vmatprep.subr.mxu0 0.0
    %847 = vmatpush1.msra.mxu0 0.0
    %848 = vmatprep.subr.mxu0 0.0
    %849 = vmatpush1.msra.mxu0 0.0
    %850 = vmatprep.subr.mxu0 0.0
    %851 = vmatpush1.msra.mxu0 0.0
    %852 = vmatprep.subr.mxu0 0.0
    %853 = vmatpush1.msra.mxu0 0.0
    %854 = vmatprep.subr.mxu0 0.0
    %855 = vmatpush1.msra.mxu0 0.0
    %856 = vmatprep.subr.mxu0 0.0
    %857 = vmatpush1.msra.mxu0 0.0
    %858 = vmatprep.subr.mxu0 0.0
    %859 = vmatpush1.msra.mxu0 0.0
    %860 = vmatprep.subr.mxu0 0.0
    %861 = vmatpush1.msra.mxu0 0.0
    %862 = vmatprep.subr.mxu0 0.0
    %863 = vmatpush1.msra.mxu0 0.0
    %864 = vmatprep.subr.mxu0 0.0
    %865 = vmatpush1.msra.mxu0 0.0
    %866 = vmatprep.subr.mxu0 0.0
    %867 = vmatpush1.msra.mxu0 0.0
    %868 = vmatprep.subr.mxu0 0.0
    %869 = vmatpush1.msra.mxu0 0.0
    %870 = vmatprep.subr.mxu0 0.0
    %871 = vmatpush1.msra.mxu0 0.0
    %872 = vmatprep.mubr.f32.mxu0 0.0
    %873 = vmatmul.mubr.f32.gmra.mrb[0].mxu0 %v803
    %v874 = vpop.f32.mrb[0].mxu0
    %v875 = vadd.f32 0.0, %v874
    %v876 = vpop.f32.mrb[0].mxu0
    %877 = vmatprep.mubr.f32.mxu0 0.0
    %878 = vmatmul.mubr.f32.gmra.mrb[0].mxu0 %v806
    %v879 = vpop.f32.mrb[0].mxu0
    %v880 = vadd.f32 0.0, %v879
    %v881 = vpop.f32.mrb[0].mxu0
    %882 = vdwg.mxu0
    %883 = vrot.lane.b32.xlu0 %v163, 64
    %v884 = vpop.permute.xlu0 %883
    %885 = vrot.lane.b32.xlu0 %v165, 64
    %v886 = vpop.permute.xlu0 %885
    %v890 = vsel %vm533, %v620, 0
    %v893 = vsel %vm533, %v621, 0
    %895 = vmatprep.subr.mxu0 0.0
    %896 = vmatpush1.msra.mxu0 %v884
    %897 = vmatprep.subr.mxu0 0.0
    %898 = vmatpush1.msra.mxu0 %v886
    %899 = vmatprep.subr.mxu0 0.0
    %900 = vmatpush1.msra.mxu0 0.0
    %901 = vmatprep.subr.mxu0 0.0
    %902 = vmatpush1.msra.mxu0 0.0
    %903 = vmatprep.subr.mxu0 0.0
    %904 = vmatpush1.msra.mxu0 0.0
    %905 = vmatprep.subr.mxu0 0.0
    %906 = vmatpush1.msra.mxu0 0.0
    %907 = vmatprep.subr.mxu0 0.0
    %908 = vmatpush1.msra.mxu0 0.0
    %909 = vmatprep.subr.mxu0 0.0
    %910 = vmatpush1.msra.mxu0 0.0
    %911 = vmatprep.subr.mxu0 0.0
    %912 = vmatpush1.msra.mxu0 0.0
    %913 = vmatprep.subr.mxu0 0.0
    %914 = vmatpush1.msra.mxu0 0.0
    %915 = vmatprep.subr.mxu0 0.0
    %916 = vmatpush1.msra.mxu0 0.0
    %917 = vmatprep.subr.mxu0 0.0
    %918 = vmatpush1.msra.mxu0 0.0
    %919 = vmatprep.subr.mxu0 0.0
    %920 = vmatpush1.msra.mxu0 0.0
    %921 = vmatprep.subr.mxu0 0.0
    %922 = vmatpush1.msra.mxu0 0.0
    %923 = vmatprep.subr.mxu0 0.0
    %924 = vmatpush1.msra.mxu0 0.0
    %925 = vmatprep.subr.mxu0 0.0
    %926 = vmatpush1.msra.mxu0 0.0
    %927 = vmatprep.subr.mxu0 0.0
    %928 = vmatpush1.msra.mxu0 0.0
    %929 = vmatprep.subr.mxu0 0.0
    %930 = vmatpush1.msra.mxu0 0.0
    %931 = vmatprep.subr.mxu0 0.0
    %932 = vmatpush1.msra.mxu0 0.0
    %933 = vmatprep.subr.mxu0 0.0
    %934 = vmatpush1.msra.mxu0 0.0
    %935 = vmatprep.subr.mxu0 0.0
    %936 = vmatpush1.msra.mxu0 0.0
    %937 = vmatprep.subr.mxu0 0.0
    %938 = vmatpush1.msra.mxu0 0.0
    %939 = vmatprep.subr.mxu0 0.0
    %940 = vmatpush1.msra.mxu0 0.0
    %941 = vmatprep.subr.mxu0 0.0
    %942 = vmatpush1.msra.mxu0 0.0
    %943 = vmatprep.subr.mxu0 0.0
    %944 = vmatpush1.msra.mxu0 0.0
    %945 = vmatprep.subr.mxu0 0.0
    %946 = vmatpush1.msra.mxu0 0.0
    %947 = vmatprep.subr.mxu0 0.0
    %948 = vmatpush1.msra.mxu0 0.0
    %949 = vmatprep.subr.mxu0 0.0
    %950 = vmatpush1.msra.mxu0 0.0
    %951 = vmatprep.subr.mxu0 0.0
    %952 = vmatpush1.msra.mxu0 0.0
    %953 = vmatprep.subr.mxu0 0.0
    %954 = vmatpush1.msra.mxu0 0.0
    %955 = vmatprep.subr.mxu0 0.0
    %956 = vmatpush1.msra.mxu0 0.0
    %957 = vmatprep.subr.mxu0 0.0
    %958 = vmatpush1.msra.mxu0 0.0
    %959 = vmatprep.mubr.f32.mxu0 0.0
    %960 = vmatmul.mubr.f32.gmra.mrb[0].mxu0 %v890
    %v961 = vpop.f32.mrb[0].mxu0
    %v962 = vadd.f32 0.0, %v961
    %v963 = vpop.f32.mrb[0].mxu0
    %964 = vmatprep.mubr.f32.mxu0 0.0
    %965 = vmatmul.mubr.f32.gmra.mrb[0].mxu0 %v893
    %v966 = vpop.f32.mrb[0].mxu0
    %v967 = vadd.f32 0.0, %v966
    %v968 = vpop.f32.mrb[0].mxu0
    %969 = vdwg.mxu0
    %972 = vrot.lane.b32.xlu0 %v788, 8
    %v973 = vpop.permute.xlu0 %972
    %974 = vrot.lane.b32.xlu0 %v793, 8
    %v975 = vpop.permute.xlu0 %974
    %980 = vrot.lane.b32.xlu0 %v875, 16
    %v981 = vpop.permute.xlu0 %980
    %982 = vrot.lane.b32.xlu0 %v880, 16
    %v983 = vpop.permute.xlu0 %982
    %988 = vrot.lane.b32.xlu0 %v962, 24
    %v989 = vpop.permute.xlu0 %988
    %990 = vrot.lane.b32.xlu0 %v967, 24
    %v991 = vpop.permute.xlu0 %990
    %v994 = vsel %vm170, %v701, %v973
    %v995 = vsel %vm170, %v706, %v975
    %v996 = vsel %vm533, %v994, %v981
    %v997 = vsel %vm533, %v995, %v983
    %vm998 = vcmask 195584
    %v999 = vsel %vm998, %v996, %v989
    %v1000 = vsel %vm998, %v997, %v991
    %v1001 = vld [vmem:[%s3 + $0x20] sm:$0xff]
    %v1002 = vld [vmem:[%s3 + $0x28] sm:$0xff]
    %v1003 = vld [vmem:[%s3 + $0x30] sm:$0xff]
    %v1004 = vld [vmem:[%s3 + $0x38] sm:$0xff]
    %v1005 = vld [vmem:[%s2 + $0x3] sm:$0x1]
    %v1006 = vlaneseq
    %v1007 = vshrl.u32 %v1006, 7
    %v1008 = vsub.s32 0, %v1007
    %v1009 = vrot.slane %v1005, %v1008
    %v1011 = vsel %vm22, %v999, 0
    %v1014 = vsel %vm22, %v1000, 0
    %1016 = vmatprep.subr.mxu0 0.0
    %1017 = vmatpush1.msra.mxu0 %v1001
    %1018 = vmatprep.subr.mxu0 0.0
    %1019 = vmatpush1.msra.mxu0 %v1002
    %1020 = vmatprep.subr.mxu0 0.0
    %1021 = vmatpush1.msra.mxu0 %v1003
    %1022 = vmatprep.subr.mxu0 0.0
    %1023 = vmatpush1.msra.mxu0 %v1004
    %1024 = vmatprep.subr.mxu0 0.0
    %1025 = vmatpush1.msra.mxu0 0.0
    %1026 = vmatprep.subr.mxu0 0.0
    %1027 = vmatpush1.msra.mxu0 0.0
    %1028 = vmatprep.subr.mxu0 0.0
    %1029 = vmatpush1.msra.mxu0 0.0
    %1030 = vmatprep.subr.mxu0 0.0
    %1031 = vmatpush1.msra.mxu0 0.0
    %1032 = vmatprep.subr.mxu0 0.0
    %1033 = vmatpush1.msra.mxu0 0.0
    %1034 = vmatprep.subr.mxu0 0.0
    %1035 = vmatpush1.msra.mxu0 0.0
    %1036 = vmatprep.subr.mxu0 0.0
    %1037 = vmatpush1.msra.mxu0 0.0
    %1038 = vmatprep.subr.mxu0 0.0
    %1039 = vmatpush1.msra.mxu0 0.0
    %1040 = vmatprep.subr.mxu0 0.0
    %1041 = vmatpush1.msra.mxu0 0.0
    %1042 = vmatprep.subr.mxu0 0.0
    %1043 = vmatpush1.msra.mxu0 0.0
    %1044 = vmatprep.subr.mxu0 0.0
    %1045 = vmatpush1.msra.mxu0 0.0
    %1046 = vmatprep.subr.mxu0 0.0
    %1047 = vmatpush1.msra.mxu0 0.0
    %1048 = vmatprep.subr.mxu0 0.0
    %1049 = vmatpush1.msra.mxu0 0.0
    %1050 = vmatprep.subr.mxu0 0.0
    %1051 = vmatpush1.msra.mxu0 0.0
    %1052 = vmatprep.subr.mxu0 0.0
    %1053 = vmatpush1.msra.mxu0 0.0
    %1054 = vmatprep.subr.mxu0 0.0
    %1055 = vmatpush1.msra.mxu0 0.0
    %1056 = vmatprep.subr.mxu0 0.0
    %1057 = vmatpush1.msra.mxu0 0.0
    %1058 = vmatprep.subr.mxu0 0.0
    %1059 = vmatpush1.msra.mxu0 0.0
    %1060 = vmatprep.subr.mxu0 0.0
    %1061 = vmatpush1.msra.mxu0 0.0
    %1062 = vmatprep.subr.mxu0 0.0
    %1063 = vmatpush1.msra.mxu0 0.0
    %1064 = vmatprep.subr.mxu0 0.0
    %1065 = vmatpush1.msra.mxu0 0.0
    %1066 = vmatprep.subr.mxu0 0.0
    %1067 = vmatpush1.msra.mxu0 0.0
    %1068 = vmatprep.subr.mxu0 0.0
    %1069 = vmatpush1.msra.mxu0 0.0
    %1070 = vmatprep.subr.mxu0 0.0
    %1071 = vmatpush1.msra.mxu0 0.0
    %1072 = vmatprep.subr.mxu0 0.0
    %1073 = vmatpush1.msra.mxu0 0.0
    %1074 = vmatprep.subr.mxu0 0.0
    %1075 = vmatpush1.msra.mxu0 0.0
    %1076 = vmatprep.subr.mxu0 0.0
    %1077 = vmatpush1.msra.mxu0 0.0
    %1078 = vmatprep.subr.mxu0 0.0
    %1079 = vmatpush1.msra.mxu0 0.0
    %1080 = vmatprep.mubr.f32.mxu0 0.0
    %1081 = vmatmul.mubr.f32.gmra.mrb[0].mxu0 %v1011
    %v1082 = vpop.f32.mrb[0].mxu0
    %v1083 = vadd.f32 %v1009, %v1082
    %v1084 = vpop.f32.mrb[0].mxu0
    %1085 = vmatprep.mubr.f32.mxu0 0.0
    %1086 = vmatmul.mubr.f32.gmra.mrb[0].mxu0 %v1014
    %v1087 = vpop.f32.mrb[0].mxu0
    %v1088 = vadd.f32 %v1009, %v1087
    %v1089 = vpop.f32.mrb[0].mxu0
    %1090 = vdwg.mxu0
    %v1091 = vadd.f32 %v60, %v1083
    %v1092 = vadd.f32 %v61, %v1088
    %v1093 = vld [vmem:[%s2 + $0x4] sm:$0x1]
    %v1094 = vld [vmem:[%s2 + $0x5] sm:$0x1]
    %v1095 = vsel %vm22, %v1091, 0.0
    %1096 = vadd.xlane.f32.xlu0 %v1095
    %v1097 = vpop.xlane.xlu0 %1096
    %v1098 = vsel %vm22, %v1092, 0.0
    %1099 = vadd.xlane.f32.xlu0 %v1098
    %v1100 = vpop.xlane.xlu0 %1099
    %v1101 = vmul.f32 %v1097, %v29
    %v1102 = vmul.f32 %v1100, %v29
    %v1103 = vsub.f32 %v1091, %v1101
    %v1104 = vsub.f32 %v1092, %v1102
    %v1105 = vmul.f32 %v1103, %v1103
    %v1106 = vmul.f32 %v1104, %v1104
    %v1107 = vsel %vm22, %v1105, 0.0
    %1108 = vadd.xlane.f32.xlu0 %v1107
    %v1109 = vpop.xlane.xlu0 %1108
    %v1110 = vsel %vm22, %v1106, 0.0
    %1111 = vadd.xlane.f32.xlu0 %v1110
    %v1112 = vpop.xlane.xlu0 %1111
    %v1113 = vmul.f32 %v1109, %v29
    %v1114 = vmul.f32 %v1112, %v29
    %v1115 = vadd.f32 %v1113, 1e-12
    %v1116 = vadd.f32 %v1114, 1e-12
    %v1117 = vrsqrt.pop %v1115
    %v1118 = vrsqrt.pop %v1116
    %v1119 = vmul.f32 %v1103, %v1117
    %v1120 = vmul.f32 %v1104, %v1118
    %v1121 = vlaneseq
    %v1122 = vshrl.u32 %v1121, 7
    %v1123 = vsub.s32 0, %v1122
    %v1124 = vrot.slane %v1093, %v1123
    %v1125 = vmul.f32 %v1119, %v1124
    %v1126 = vmul.f32 %v1120, %v1124
    %v1127 = vlaneseq
    %v1128 = vshrl.u32 %v1127, 7
    %v1129 = vsub.s32 0, %v1128
    %v1130 = vrot.slane %v1094, %v1129
    %v1131 = vadd.f32 %v1125, %v1130
    %v1132 = vadd.f32 %v1126, %v1130
    %v1133 = vld [vmem:[%s3 + $0x40] sm:$0xff]
    %v1134 = vld [vmem:[%s3 + $0x48] sm:$0xff]
    %v1135 = vld [vmem:[%s3 + $0x50] sm:$0xff]
    %v1136 = vld [vmem:[%s3 + $0x58] sm:$0xff]
    %v1137 = vld [vmem:[%s2 + $0x6] sm:$0x1]
    %v1138 = vlaneseq
    %v1139 = vshrl.u32 %v1138, 7
    %v1140 = vsub.s32 0, %v1139
    %v1141 = vrot.slane %v1137, %v1140
    %v1143 = vsel %vm22, %v1131, 0
    %v1146 = vsel %vm22, %v1132, 0
    %1148 = vmatprep.subr.mxu0 0.0
    %1149 = vmatpush1.msra.mxu0 %v1133
    %1150 = vmatprep.subr.mxu0 0.0
    %1151 = vmatpush1.msra.mxu0 %v1134
    %1152 = vmatprep.subr.mxu0 0.0
    %1153 = vmatpush1.msra.mxu0 %v1135
    %1154 = vmatprep.subr.mxu0 0.0
    %1155 = vmatpush1.msra.mxu0 %v1136
    %1156 = vmatprep.subr.mxu0 0.0
    %1157 = vmatpush1.msra.mxu0 0.0
    %1158 = vmatprep.subr.mxu0 0.0
    %1159 = vmatpush1.msra.mxu0 0.0
    %1160 = vmatprep.subr.mxu0 0.0
    %1161 = vmatpush1.msra.mxu0 0.0
    %1162 = vmatprep.subr.mxu0 0.0
    %1163 = vmatpush1.msra.mxu0 0.0
    %1164 = vmatprep.subr.mxu0 0.0
    %1165 = vmatpush1.msra.mxu0 0.0
    %1166 = vmatprep.subr.mxu0 0.0
    %1167 = vmatpush1.msra.mxu0 0.0
    %1168 = vmatprep.subr.mxu0 0.0
    %1169 = vmatpush1.msra.mxu0 0.0
    %1170 = vmatprep.subr.mxu0 0.0
    %1171 = vmatpush1.msra.mxu0 0.0
    %1172 = vmatprep.subr.mxu0 0.0
    %1173 = vmatpush1.msra.mxu0 0.0
    %1174 = vmatprep.subr.mxu0 0.0
    %1175 = vmatpush1.msra.mxu0 0.0
    %1176 = vmatprep.subr.mxu0 0.0
    %1177 = vmatpush1.msra.mxu0 0.0
    %1178 = vmatprep.subr.mxu0 0.0
    %1179 = vmatpush1.msra.mxu0 0.0
    %1180 = vmatprep.subr.mxu0 0.0
    %1181 = vmatpush1.msra.mxu0 0.0
    %1182 = vmatprep.subr.mxu0 0.0
    %1183 = vmatpush1.msra.mxu0 0.0
    %1184 = vmatprep.subr.mxu0 0.0
    %1185 = vmatpush1.msra.mxu0 0.0
    %1186 = vmatprep.subr.mxu0 0.0
    %1187 = vmatpush1.msra.mxu0 0.0
    %1188 = vmatprep.subr.mxu0 0.0
    %1189 = vmatpush1.msra.mxu0 0.0
    %1190 = vmatprep.subr.mxu0 0.0
    %1191 = vmatpush1.msra.mxu0 0.0
    %1192 = vmatprep.subr.mxu0 0.0
    %1193 = vmatpush1.msra.mxu0 0.0
    %1194 = vmatprep.subr.mxu0 0.0
    %1195 = vmatpush1.msra.mxu0 0.0
    %1196 = vmatprep.subr.mxu0 0.0
    %1197 = vmatpush1.msra.mxu0 0.0
    %1198 = vmatprep.subr.mxu0 0.0
    %1199 = vmatpush1.msra.mxu0 0.0
    %1200 = vmatprep.subr.mxu0 0.0
    %1201 = vmatpush1.msra.mxu0 0.0
    %1202 = vmatprep.subr.mxu0 0.0
    %1203 = vmatpush1.msra.mxu0 0.0
    %1204 = vmatprep.subr.mxu0 0.0
    %1205 = vmatpush1.msra.mxu0 0.0
    %1206 = vmatprep.subr.mxu0 0.0
    %1207 = vmatpush1.msra.mxu0 0.0
    %1208 = vmatprep.subr.mxu0 0.0
    %1209 = vmatpush1.msra.mxu0 0.0
    %1210 = vmatprep.subr.mxu0 0.0
    %1211 = vmatpush1.msra.mxu0 0.0
    %1212 = vmatprep.mubr.f32.mxu0 0.0
    %1213 = vmatmul.mubr.f32.gmra.mrb[0].mxu0 %v1143
    %v1214 = vpop.f32.mrb[0].mxu0
    %v1215 = vadd.f32 %v1141, %v1214
    %v1216 = vpop.f32.mrb[0].mxu0
    %1217 = vmatprep.mubr.f32.mxu0 0.0
    %1218 = vmatmul.mubr.f32.gmra.mrb[0].mxu0 %v1146
    %v1219 = vpop.f32.mrb[0].mxu0
    %v1220 = vadd.f32 %v1141, %v1219
    %v1221 = vpop.f32.mrb[0].mxu0
    %1222 = vdwg.mxu0
    %v1223 = vmul.f32 %v1215, %v1215
    %v1224 = vmul.f32 %v1220, %v1220
    %v1225 = vmul.f32 %v1215, %v1223
    %v1226 = vmul.f32 %v1220, %v1224
    %v1227 = vmul.f32 %v1225, 0.044715
    %v1228 = vmul.f32 %v1226, 0.044715
    %v1229 = vadd.f32 %v1215, %v1227
    %v1230 = vadd.f32 %v1220, %v1228
    %v1231 = vmul.f32 %v1229, 0.7978846
    %v1232 = vmul.f32 %v1230, 0.7978846
    %v1233 = vtanh.pop %v1231
    %v1234 = vtanh.pop %v1232
    %v1235 = vadd.f32 %v1233, 1.0
    %v1236 = vadd.f32 %v1234, 1.0
    %v1237 = vmul.f32 %v1235, 0.5
    %v1238 = vmul.f32 %v1236, 0.5
    %v1239 = vmul.f32 %v1215, %v1237
    %v1240 = vmul.f32 %v1220, %v1238
    %v1241 = vld [vmem:[%s3 + $0x60] sm:$0xff]
    %v1242 = vld [vmem:[%s3 + $0x68] sm:$0xff]
    %v1243 = vld [vmem:[%s3 + $0x70] sm:$0xff]
    %v1244 = vld [vmem:[%s3 + $0x78] sm:$0xff]
    %v1245 = vld [vmem:[%s3 + $0x80] sm:$0xff]
    %v1246 = vld [vmem:[%s3 + $0x88] sm:$0xff]
    %v1247 = vld [vmem:[%s3 + $0x90] sm:$0xff]
    %v1248 = vld [vmem:[%s3 + $0x98] sm:$0xff]
    %v1249 = vld [vmem:[%s2 + $0x7] sm:$0x1]
    %v1250 = vlaneseq
    %v1251 = vshrl.u32 %v1250, 7
    %v1252 = vsub.s32 0, %v1251
    %v1253 = vrot.slane %v1249, %v1252
    %vm1254 = vcmask 523264
    %v1256 = vsel %vm1254, %v1239, 0
    %v1259 = vsel %vm1254, %v1240, 0
    %1261 = vmatprep.subr.mxu0 0.0
    %1262 = vmatpush1.msra.mxu0 %v1241
    %1263 = vmatprep.subr.mxu0 0.0
    %1264 = vmatpush1.msra.mxu0 %v1242
    %1265 = vmatprep.subr.mxu0 0.0
    %1266 = vmatpush1.msra.mxu0 %v1243
    %1267 = vmatprep.subr.mxu0 0.0
    %1268 = vmatpush1.msra.mxu0 %v1244
    %1269 = vmatprep.subr.mxu0 0.0
    %1270 = vmatpush1.msra.mxu0 %v1245
    %1271 = vmatprep.subr.mxu0 0.0
    %1272 = vmatpush1.msra.mxu0 %v1246
    %1273 = vmatprep.subr.mxu0 0.0
    %1274 = vmatpush1.msra.mxu0 %v1247
    %1275 = vmatprep.subr.mxu0 0.0
    %1276 = vmatpush1.msra.mxu0 %v1248
    %1277 = vmatprep.subr.mxu0 0.0
    %1278 = vmatpush1.msra.mxu0 0.0
    %1279 = vmatprep.subr.mxu0 0.0
    %1280 = vmatpush1.msra.mxu0 0.0
    %1281 = vmatprep.subr.mxu0 0.0
    %1282 = vmatpush1.msra.mxu0 0.0
    %1283 = vmatprep.subr.mxu0 0.0
    %1284 = vmatpush1.msra.mxu0 0.0
    %1285 = vmatprep.subr.mxu0 0.0
    %1286 = vmatpush1.msra.mxu0 0.0
    %1287 = vmatprep.subr.mxu0 0.0
    %1288 = vmatpush1.msra.mxu0 0.0
    %1289 = vmatprep.subr.mxu0 0.0
    %1290 = vmatpush1.msra.mxu0 0.0
    %1291 = vmatprep.subr.mxu0 0.0
    %1292 = vmatpush1.msra.mxu0 0.0
    %1293 = vmatprep.subr.mxu0 0.0
    %1294 = vmatpush1.msra.mxu0 0.0
    %1295 = vmatprep.subr.mxu0 0.0
    %1296 = vmatpush1.msra.mxu0 0.0
    %1297 = vmatprep.subr.mxu0 0.0
    %1298 = vmatpush1.msra.mxu0 0.0
    %1299 = vmatprep.subr.mxu0 0.0
    %1300 = vmatpush1.msra.mxu0 0.0
    %1301 = vmatprep.subr.mxu0 0.0
    %1302 = vmatpush1.msra.mxu0 0.0
    %1303 = vmatprep.subr.mxu0 0.0
    %1304 = vmatpush1.msra.mxu0 0.0
    %1305 = vmatprep.subr.mxu0 0.0
    %1306 = vmatpush1.msra.mxu0 0.0
    %1307 = vmatprep.subr.mxu0 0.0
    %1308 = vmatpush1.msra.mxu0 0.0
    %1309 = vmatprep.subr.mxu0 0.0
    %1310 = vmatpush1.msra.mxu0 0.0
    %1311 = vmatprep.subr.mxu0 0.0
    %1312 = vmatpush1.msra.mxu0 0.0
    %1313 = vmatprep.subr.mxu0 0.0
    %1314 = vmatpush1.msra.mxu0 0.0
    %1315 = vmatprep.subr.mxu0 0.0
    %1316 = vmatpush1.msra.mxu0 0.0
    %1317 = vmatprep.subr.mxu0 0.0
    %1318 = vmatpush1.msra.mxu0 0.0
    %1319 = vmatprep.subr.mxu0 0.0
    %1320 = vmatpush1.msra.mxu0 0.0
    %1321 = vmatprep.subr.mxu0 0.0
    %1322 = vmatpush1.msra.mxu0 0.0
    %1323 = vmatprep.subr.mxu0 0.0
    %1324 = vmatpush1.msra.mxu0 0.0
    %1325 = vmatprep.mubr.f32.mxu0 0.0
    %1326 = vmatmul.mubr.f32.gmra.mrb[0].mxu0 %v1256
    %v1327 = vpop.f32.mrb[0].mxu0
    %v1328 = vadd.f32 %v1253, %v1327
    %v1329 = vpop.f32.mrb[0].mxu0
    %1330 = vmatprep.mubr.f32.mxu0 0.0
    %1331 = vmatmul.mubr.f32.gmra.mrb[0].mxu0 %v1259
    %v1332 = vpop.f32.mrb[0].mxu0
    %v1333 = vadd.f32 %v1253, %v1332
    %v1334 = vpop.f32.mrb[0].mxu0
    %1335 = vdwg.mxu0
    %v1336 = vadd.f32 %v1131, %v1328
    %v1337 = vadd.f32 %v1132, %v1333
    %v1338 = vld [vmem:[%s2 + $0x8] sm:$0x1]
    %v1339 = vld [vmem:[%s2 + $0x9] sm:$0x1]
    %v1340 = vsel %vm22, %v1336, 0.0
    %1341 = vadd.xlane.f32.xlu0 %v1340
    %v1342 = vpop.xlane.xlu0 %1341
    %v1343 = vsel %vm22, %v1337, 0.0
    %1344 = vadd.xlane.f32.xlu0 %v1343
    %v1345 = vpop.xlane.xlu0 %1344
    %v1346 = vmul.f32 %v1342, %v29
    %v1347 = vmul.f32 %v1345, %v29
    %v1348 = vsub.f32 %v1336, %v1346
    %v1349 = vsub.f32 %v1337, %v1347
    %v1350 = vmul.f32 %v1348, %v1348
    %v1351 = vmul.f32 %v1349, %v1349
    %v1352 = vsel %vm22, %v1350, 0.0
    %1353 = vadd.xlane.f32.xlu0 %v1352
    %v1354 = vpop.xlane.xlu0 %1353
    %v1355 = vsel %vm22, %v1351, 0.0
    %1356 = vadd.xlane.f32.xlu0 %v1355
    %v1357 = vpop.xlane.xlu0 %1356
    %v1358 = vmul.f32 %v1354, %v29
    %v1359 = vmul.f32 %v1357, %v29
    %v1360 = vadd.f32 %v1358, 1e-12
    %v1361 = vadd.f32 %v1359, 1e-12
    %v1362 = vrsqrt.pop %v1360
    %v1363 = vrsqrt.pop %v1361
    %v1364 = vmul.f32 %v1348, %v1362
    %v1365 = vmul.f32 %v1349, %v1363
    %v1366 = vlaneseq
    %v1367 = vshrl.u32 %v1366, 7
    %v1368 = vsub.s32 0, %v1367
    %v1369 = vrot.slane %v1338, %v1368
    %v1370 = vmul.f32 %v1364, %v1369
    %v1371 = vmul.f32 %v1365, %v1369
    %v1372 = vlaneseq
    %v1373 = vshrl.u32 %v1372, 7
    %v1374 = vsub.s32 0, %v1373
    %v1375 = vrot.slane %v1339, %v1374
    %v1376 = vadd.f32 %v1370, %v1375
    %v1377 = vadd.f32 %v1371, %v1375
    %v1379 = vrot.slane %v1377, 7
    %vm1381 = vcmask 1040384
    %v1382 = vsel %vm1381, %v1376, %v1379
    %v1383 = vld [vmem:[%s3 + $0xa0] sm:$0xff]
    %v1384 = vld [vmem:[%s3 + $0xa8] sm:$0xff]
    %v1385 = vld [vmem:[%s3 + $0xb0] sm:$0xff]
    %v1386 = vld [vmem:[%s3 + $0xb8] sm:$0xff]
    %v1387 = vld [vmem:[%s2 + $0xa] sm:$0x1]
    %v1388 = vlaneseq
    %v1389 = vshrl.u32 %v1388, 7
    %v1390 = vsub.s32 0, %v1389
    %v1391 = vrot.slane %v1387, %v1390
    %v1393 = vsel %vm22, %v1382, 0
    %1395 = vmatprep.subr.mxu0 0.0
    %1396 = vmatpush1.msra.mxu0 %v1383
    %1397 = vmatprep.subr.mxu0 0.0
    %1398 = vmatpush1.msra.mxu0 %v1384
    %1399 = vmatprep.subr.mxu0 0.0
    %1400 = vmatpush1.msra.mxu0 %v1385
    %1401 = vmatprep.subr.mxu0 0.0
    %1402 = vmatpush1.msra.mxu0 %v1386
    %1403 = vmatprep.subr.mxu0 0.0
    %1404 = vmatpush1.msra.mxu0 0.0
    %1405 = vmatprep.subr.mxu0 0.0
    %1406 = vmatpush1.msra.mxu0 0.0
    %1407 = vmatprep.subr.mxu0 0.0
    %1408 = vmatpush1.msra.mxu0 0.0
    %1409 = vmatprep.subr.mxu0 0.0
    %1410 = vmatpush1.msra.mxu0 0.0
    %1411 = vmatprep.subr.mxu0 0.0
    %1412 = vmatpush1.msra.mxu0 0.0
    %1413 = vmatprep.subr.mxu0 0.0
    %1414 = vmatpush1.msra.mxu0 0.0
    %1415 = vmatprep.subr.mxu0 0.0
    %1416 = vmatpush1.msra.mxu0 0.0
    %1417 = vmatprep.subr.mxu0 0.0
    %1418 = vmatpush1.msra.mxu0 0.0
    %1419 = vmatprep.subr.mxu0 0.0
    %1420 = vmatpush1.msra.mxu0 0.0
    %1421 = vmatprep.subr.mxu0 0.0
    %1422 = vmatpush1.msra.mxu0 0.0
    %1423 = vmatprep.subr.mxu0 0.0
    %1424 = vmatpush1.msra.mxu0 0.0
    %1425 = vmatprep.subr.mxu0 0.0
    %1426 = vmatpush1.msra.mxu0 0.0
    %1427 = vmatprep.subr.mxu0 0.0
    %1428 = vmatpush1.msra.mxu0 0.0
    %1429 = vmatprep.subr.mxu0 0.0
    %1430 = vmatpush1.msra.mxu0 0.0
    %1431 = vmatprep.subr.mxu0 0.0
    %1432 = vmatpush1.msra.mxu0 0.0
    %1433 = vmatprep.subr.mxu0 0.0
    %1434 = vmatpush1.msra.mxu0 0.0
    %1435 = vmatprep.subr.mxu0 0.0
    %1436 = vmatpush1.msra.mxu0 0.0
    %1437 = vmatprep.subr.mxu0 0.0
    %1438 = vmatpush1.msra.mxu0 0.0
    %1439 = vmatprep.subr.mxu0 0.0
    %1440 = vmatpush1.msra.mxu0 0.0
    %1441 = vmatprep.subr.mxu0 0.0
    %1442 = vmatpush1.msra.mxu0 0.0
    %1443 = vmatprep.subr.mxu0 0.0
    %1444 = vmatpush1.msra.mxu0 0.0
    %1445 = vmatprep.subr.mxu0 0.0
    %1446 = vmatpush1.msra.mxu0 0.0
    %1447 = vmatprep.subr.mxu0 0.0
    %1448 = vmatpush1.msra.mxu0 0.0
    %1449 = vmatprep.subr.mxu0 0.0
    %1450 = vmatpush1.msra.mxu0 0.0
    %1451 = vmatprep.subr.mxu0 0.0
    %1452 = vmatpush1.msra.mxu0 0.0
    %1453 = vmatprep.subr.mxu0 0.0
    %1454 = vmatpush1.msra.mxu0 0.0
    %1455 = vmatprep.subr.mxu0 0.0
    %1456 = vmatpush1.msra.mxu0 0.0
    %1457 = vmatprep.subr.mxu0 0.0
    %1458 = vmatpush1.msra.mxu0 0.0
    %1459 = vmatprep.mubr.f32.mxu0 0.0
    %1460 = vmatmul.mubr.f32.gmra.mrb[0].mxu0 %v1393
    %v1461 = vpop.f32.mrb[0].mxu0
    %v1462 = vadd.f32 %v1391, %v1461
    %v1463 = vpop.f32.mrb[0].mxu0
    %1464 = vdwg.mxu0
    %v1465 = vmax.f32 %v1462, 0.0
    %v1466 = vld [vmem:[%s3 + $0xc0] sm:$0xff]
    %v1467 = vld [vmem:[%s3 + $0xc8] sm:$0xff]
    %v1468 = vld [vmem:[%s3 + $0xd0] sm:$0xff]
    %v1469 = vld [vmem:[%s3 + $0xd8] sm:$0xff]
    %v1470 = vld [vmem:[%s2 + $0xb] sm:$0x1]
    %v1471 = vlaneseq
    %v1472 = vshrl.u32 %v1471, 7
    %v1473 = vsub.s32 0, %v1472
    %v1474 = vrot.slane %v1470, %v1473
    %v1476 = vsel %vm22, %v1465, 0
    %1478 = vmatprep.subr.mxu0 0.0
    %1479 = vmatpush1.msra.mxu0 %v1466
    %1480 = vmatprep.subr.mxu0 0.0
    %1481 = vmatpush1.msra.mxu0 %v1467
    %1482 = vmatprep.subr.mxu0 0.0
    %1483 = vmatpush1.msra.mxu0 %v1468
    %1484 = vmatprep.subr.mxu0 0.0
    %1485 = vmatpush1.msra.mxu0 %v1469
    %1486 = vmatprep.subr.mxu0 0.0
    %1487 = vmatpush1.msra.mxu0 0.0
    %1488 = vmatprep.subr.mxu0 0.0
    %1489 = vmatpush1.msra.mxu0 0.0
    %1490 = vmatprep.subr.mxu0 0.0
    %1491 = vmatpush1.msra.mxu0 0.0
    %1492 = vmatprep.subr.mxu0 0.0
    %1493 = vmatpush1.msra.mxu0 0.0
    %1494 = vmatprep.subr.mxu0 0.0
    %1495 = vmatpush1.msra.mxu0 0.0
    %1496 = vmatprep.subr.mxu0 0.0
    %1497 = vmatpush1.msra.mxu0 0.0
    %1498 = vmatprep.subr.mxu0 0.0
    %1499 = vmatpush1.msra.mxu0 0.0
    %1500 = vmatprep.subr.mxu0 0.0
    %1501 = vmatpush1.msra.mxu0 0.0
    %1502 = vmatprep.subr.mxu0 0.0
    %1503 = vmatpush1.msra.mxu0 0.0
    %1504 = vmatprep.subr.mxu0 0.0
    %1505 = vmatpush1.msra.mxu0 0.0
    %1506 = vmatprep.subr.mxu0 0.0
    %1507 = vmatpush1.msra.mxu0 0.0
    %1508 = vmatprep.subr.mxu0 0.0
    %1509 = vmatpush1.msra.mxu0 0.0
    %1510 = vmatprep.subr.mxu0 0.0
    %1511 = vmatpush1.msra.mxu0 0.0
    %1512 = vmatprep.subr.mxu0 0.0
    %1513 = vmatpush1.msra.mxu0 0.0
    %1514 = vmatprep.subr.mxu0 0.0
    %1515 = vmatpush1.msra.mxu0 0.0
    %1516 = vmatprep.subr.mxu0 0.0
    %1517 = vmatpush1.msra.mxu0 0.0
    %1518 = vmatprep.subr.mxu0 0.0
    %1519 = vmatpush1.msra.mxu0 0.0
    %1520 = vmatprep.subr.mxu0 0.0
    %1521 = vmatpush1.msra.mxu0 0.0
    %1522 = vmatprep.subr.mxu0 0.0
    %1523 = vmatpush1.msra.mxu0 0.0
    %1524 = vmatprep.subr.mxu0 0.0
    %1525 = vmatpush1.msra.mxu0 0.0
    %1526 = vmatprep.subr.mxu0 0.0
    %1527 = vmatpush1.msra.mxu0 0.0
    %1528 = vmatprep.subr.mxu0 0.0
    %1529 = vmatpush1.msra.mxu0 0.0
    %1530 = vmatprep.subr.mxu0 0.0
    %1531 = vmatpush1.msra.mxu0 0.0
    %1532 = vmatprep.subr.mxu0 0.0
    %1533 = vmatpush1.msra.mxu0 0.0
    %1534 = vmatprep.subr.mxu0 0.0
    %1535 = vmatpush1.msra.mxu0 0.0
    %1536 = vmatprep.subr.mxu0 0.0
    %1537 = vmatpush1.msra.mxu0 0.0
    %1538 = vmatprep.subr.mxu0 0.0
    %1539 = vmatpush1.msra.mxu0 0.0
    %1540 = vmatprep.subr.mxu0 0.0
    %1541 = vmatpush1.msra.mxu0 0.0
    %1542 = vmatprep.mubr.f32.mxu0 0.0
    %1543 = vmatmul.mubr.f32.gmra.mrb[0].mxu0 %v1476
    %v1544 = vpop.f32.mrb[0].mxu0
    %v1545 = vadd.f32 %v1474, %v1544
    %v1546 = vpop.f32.mrb[0].mxu0
    %1547 = vdwg.mxu0
    %v1548 = vmul.f32 %v1545, %v1545
    %vm1549 = vcmask 1041408
    %v1550 = vsel %vm1549, %v1548, 0.0
    %1551 = vadd.xlane.f32.xlu0 %v1550
    %v1552 = vpop.xlane.xlu0 %1551
    %v1553 = vmax.f32 %v1552, 1e-24
    %v1554 = vrsqrt.pop %v1553
    %v1555 = vmul.f32 %v1545, %v1554
    %1556 = vst [vmem:[#allocation2] sm:$0x3] %v1555
    // Predicated region
    $region18: #{reasoning_path_encoder_forward.1} parent=1 // pred_check
      _
    $region19: #{reasoning_path_encoder_forward.1} parent=1 // pred_check_branch
      %1558 = sbr.rel (0) target = $region21
    $region20: #{reasoning_path_encoder_forward.1} parent=1 // pred_region
      %s1560 = ssub.s32 32, 32
      %1561 = vsyncadd [#allocation3], %s1560
      %s1563 = sshll.u32 [#allocation2], 4
      %s1564 = int_to_ptr.vmem [resolvable:$true] %s1563
      %1566 = dma.vmem_to_hbm [thread:$0]  %s1564, 32, %s4, [#allocation3]
    $region21: #{reasoning_path_encoder_forward.1} parent=1 // pred_fallthru
      _
    // Predicated region
    $region22: #{reasoning_path_encoder_forward.1} parent=1 // pred_check
      _
    $region23: #{reasoning_path_encoder_forward.1} parent=1 // pred_check_branch
      %1568 = sbr.rel (0) target = $region25
    $region24: #{reasoning_path_encoder_forward.1} parent=1 // pred_region
      %1569 = dma.done [#allocation3], 32
    $region25: #{reasoning_path_encoder_forward.1} parent=1 // pred_fallthru
      _
    %1570 = vsyncpa [#allocation3], 1

</llo_original>
